<compile_context>
chip_gen: v7x
topology: tpu7x:2x2x1
jax: 0.10.0
libtpu: 0.0.40
codegen_flags: <defaults>
</compile_context>

<pallas_src>
import functools

import jax
import jax.numpy as jnp
from jax.experimental import pallas as pl
from jax.experimental.pallas import tpu as pltpu

_LANE = 128
_SUBLANE = 8


def _round_up(x, m):
    return ((x + m - 1) // m) * m


def _softplus(x):
    # == F.softplus, numerically stable (EUP exp/log)
    return jnp.logaddexp(0.0, x)


# ----------------------------------------------------------------------------
# Fused Pallas kernel: the entire Bayesian MLP forward for one batch tile
# ----------------------------------------------------------------------------
def _fused_bayes_mlp_kernel(x_ref, *refs, n_layers, act):
    """refs = (wt_mu_0, wt_rho_0, eps_w_0, b_mu_0, b_rho_0, eps_b_0, ..., out_ref)."""
    out_ref = refs[-1]
    params = refs[:-1]

    h = x_ref[...]                                              # (tm, d0_pad) f32
    for li in range(n_layers):
        wt_mu, wt_rho, eps_w, b_mu, b_rho, eps_b = params[6 * li: 6 * li + 6]

        # Re-parameterised sample:  W = mu + softplus(rho) * eps,  eps ~ N(0,1)
        w = wt_mu[...] + _softplus(wt_rho[...]) * eps_w[...]    # (din_p, dout_p) f32
        b = b_mu[...] + _softplus(b_rho[...]) * eps_b[...]      # (1, dout_p)     f32

        # F.linear with pre-transposed weight: y = x @ W  (bf16 in, f32 acc, MXU)
        y = jnp.dot(h.astype(jnp.bfloat16), w.astype(jnp.bfloat16),
                    preferred_element_type=jnp.float32)
        y = y + b                                               # broadcasts over rows

        if li < n_layers - 1:
            y = jnp.tanh(y) if act == "tanh" else jnp.maximum(y, 0.0)
        h = y

    out_ref[...] = h.astype(out_ref.dtype)


def bayes_mlp_forward(x2d, flat_inputs, padded_dims, out_features, act, *, tm=None):
    """x2d: (N, in_features) f32. Returns (N, out_features) f32."""
    n, d0 = x2d.shape
    d0_pad = padded_dims[0][0]
    dlast_pad = padded_dims[-1][1]
    n_layers = len(padded_dims)

    # Batch tiling: 256-row tiles for large batches (MXU friendly on v6e/v7x),
    # otherwise a single sublane-aligned tile.
    if tm is None:
        tm = 256 if n >= 256 else _round_up(max(n, 1), _SUBLANE)
    n_pad = _round_up(n, tm)
    x_pad = jnp.zeros((n_pad, d0_pad), jnp.float32).at[:n, :d0].set(x2d)

    grid = (n_pad // tm,)
    in_specs = [pl.BlockSpec((tm, d0_pad), lambda i: (i, 0))]
    for (din_p, dout_p) in padded_dims:
        in_specs += [
            pl.BlockSpec((din_p, dout_p), lambda i: (0, 0)),    # wt_mu  (resident)
            pl.BlockSpec((din_p, dout_p), lambda i: (0, 0)),    # wt_rho (resident)
            pl.BlockSpec((din_p, dout_p), lambda i: (0, 0)),    # eps_w  (resident)
            pl.BlockSpec((1, dout_p), lambda i: (0, 0)),        # b_mu
            pl.BlockSpec((1, dout_p), lambda i: (0, 0)),        # b_rho
            pl.BlockSpec((1, dout_p), lambda i: (0, 0)),        # eps_b
        ]
    out_specs = pl.BlockSpec((tm, dlast_pad), lambda i: (i, 0))

    # VMEM budgeting: weights are fully resident here (x2 for double buffering).
    param_bytes = sum(4 * (3 * di * do + 3 * do) for di, do in padded_dims)
    act_bytes = 4 * tm * max(max(di, do) for di, do in padded_dims)
    est = 2 * param_bytes + 6 * act_bytes
    vmem_limit = None
    if est > 24 * 1024 * 1024:
        # TODO(synk): layers too wide for resident weights need a K/N-tiled grid
        # (per-layer tile sizes, bias/act epilogues under pl.when); this fused
        # path assumes each layer's mu/rho/eps fit in VMEM.
        vmem_limit = min(est + (8 << 20), 96 << 20)

    compiler_params = pltpu.CompilerParams(
        dimension_semantics=("parallel",),       # shard batch tiles across TCs (v7x)
        vmem_limit_bytes=vmem_limit,
    )

    kernel = functools.partial(_fused_bayes_mlp_kernel, n_layers=n_layers, act=act)
    out = pl.pallas_call(
        kernel,
        out_shape=jax.ShapeDtypeStruct((n_pad, dlast_pad), jnp.float32),
        grid=grid,
        in_specs=in_specs,
        out_specs=out_specs,
        compiler_params=compiler_params,
    )(x_pad, *flat_inputs)
    return out[:n, :out_features]


# ----------------------------------------------------------------------------
# BayesianMLP (forward pass only)
# ----------------------------------------------------------------------------
class BayesianMLP:
    def __init__(self, input_size, hidden_sizes, output_size, act_func,
                 prior_prec=1.0, bias_prior_prec=1e-6):
        self.input_size = input_size
        if output_size:
            self.output_size = output_size
            self.squeeze_output = False
        else:
            self.output_size = 1
            self.squeeze_output = True
        self.act = "tanh" if act_func == "tanh" else "relu"

        if len(hidden_sizes) == 0:
            dims = [(self.input_size, self.output_size)]
        else:
            dims = list(zip([self.input_size] + hidden_sizes[:-1], hidden_sizes))
            dims.append((hidden_sizes[-1], self.output_size))
        self.layer_dims = dims

        # StochasticLinear.reset_parameters(): weight_mu = 0, weight_spsigma = -1,
        # bias_mu = 0, bias_spsigma = -1.
        self.params = []
        for (din, dout) in dims:
            self.params.append(dict(
                w_mu=jnp.zeros((dout, din), jnp.float32),
                w_rho=jnp.full((dout, din), -1.0, jnp.float32),
                b_mu=jnp.zeros((dout,), jnp.float32),
                b_rho=jnp.full((dout,), -1.0, jnp.float32),
            ))
        self._prepare_padded_params()

    def _prepare_padded_params(self):
        """Pre-transpose to (in, out) and pad feature dims to multiples of 128.

        mu is zero-padded; eps is zero-padded at sample time, so padded weight
        rows/columns are exactly zero regardless of the rho pad value.
        """
        self.padded_dims = []
        self._padded_params = []
        for (din, dout), p in zip(self.layer_dims, self.params):
            din_p = _round_up(din, _LANE)
            dout_p = _round_up(dout, _LANE)
            self.padded_dims.append((din_p, dout_p))
            wt_mu = jnp.zeros((din_p, dout_p), jnp.float32).at[:din, :dout].set(p["w_mu"].T)
            wt_rho = jnp.zeros((din_p, dout_p), jnp.float32).at[:din, :dout].set(p["w_rho"].T)
            b_mu = jnp.zeros((1, dout_p), jnp.float32).at[0, :dout].set(p["b_mu"])
            b_rho = jnp.zeros((1, dout_p), jnp.float32).at[0, :dout].set(p["b_rho"])
            self._padded_params.append((wt_mu, wt_rho, b_mu, b_rho))

    def _sample_eps(self, key):
        """One eps draw per forward (same sampled weights for the whole batch)."""
        eps = []
        keys = jax.random.split(key, 2 * len(self.layer_dims))
        for li, ((din, dout), (din_p, dout_p)) in enumerate(
                zip(self.layer_dims, self.padded_dims)):
            ew = jax.random.normal(keys[2 * li], (din, dout), jnp.float32)
            eb = jax.random.normal(keys[2 * li + 1], (dout,), jnp.float32)
            eps_w = jnp.zeros((din_p, dout_p), jnp.float32).at[:din, :dout].set(ew)
            eps_b = jnp.zeros((1, dout_p), jnp.float32).at[0, :dout].set(eb)
            eps.append((eps_w, eps_b))
        return eps

    def forward(self, x, key):
        out = x.reshape(-1, self.input_size).astype(jnp.float32)
        eps = self._sample_eps(key)
        flat_inputs = []
        for (wt_mu, wt_rho, b_mu, b_rho), (eps_w, eps_b) in zip(self._padded_params, eps):
            flat_inputs += [wt_mu, wt_rho, eps_w, b_mu, b_rho, eps_b]
        out = bayes_mlp_forward(out, flat_inputs, self.padded_dims,
                                self.output_size, self.act)
        if self.squeeze_output:
            out = jnp.squeeze(out)
        return out

    # TODO(synk): kl_divergence() is a training-time scalar reduction, not part
    # of the forward pass; it is left to plain JAX and not implemented here.


# ----------------------------------------------------------------------------
if __name__ == "__main__":
    key = jax.random.PRNGKey(0)
    k_x, k_eps = jax.random.split(key)

    input_size = 32
    hidden_sizes = [32, 32]
    output_size = 16

    model = BayesianMLP(input_size, hidden_sizes, output_size, act_func="tanh")

    # x of shape (2, 4, 16): forward reshapes it to (-1, 32) -> (4, 32)
    x = jax.random.normal(k_x, (2, 4, 16), jnp.float32)

    logits = model.forward(x, k_eps)
    jax.block_until_ready(logits)
    assert logits.shape == (4, output_size), logits.shape
    assert bool(jnp.all(jnp.isfinite(logits)))

    # Deterministic sanity check: set rho = -30 so softplus(rho)*eps ~ 1e-13 and
    # the sampled weights collapse to mu; the fused kernel must then match a
    # plain-JAX reference (same bf16-in / f32-acc matmul), up to tiny rounding.
    check = BayesianMLP(input_size, hidden_sizes, output_size, act_func="tanh")
    kp = jax.random.split(key, 2 * len(check.layer_dims))
    for i, ((din, dout), p) in enumerate(zip(check.layer_dims, check.params)):
        p["w_mu"] = 0.3 * jax.random.normal(kp[2 * i], (dout, din), jnp.float32)
        p["b_mu"] = 0.3 * jax.random.normal(kp[2 * i + 1], (dout,), jnp.float32)
        p["w_rho"] = jnp.full((dout, din), -30.0, jnp.float32)
        p["b_rho"] = jnp.full((dout,), -30.0, jnp.float32)
    check._prepare_padded_params()
    got = check.forward(x, k_eps)

    ref = x.reshape(-1, input_size)
    for i, p in enumerate(check.params):
        ref = jnp.dot(ref.astype(jnp.bfloat16), p["w_mu"].T.astype(jnp.bfloat16),
                      preferred_element_type=jnp.float32) + p["b_mu"]
        if i < len(check.params) - 1:
            ref = jnp.tanh(ref)
    jax.block_until_ready((got, ref))
    max_err = float(jnp.max(jnp.abs(got - ref)))
    assert max_err < 5e-2, max_err

    print("KERNEL_OK")
</pallas_src>

<mosaic_0001>
module attributes {stable_mosaic.version = 11 : i64} {
  func.func @_fused_bayes_mlp_kernel(%arg0: i32, %arg1: memref<8x128xf32, #tpu.memory_space<vmem>>, %arg2: memref<128x128xf32, #tpu.memory_space<vmem>>, %arg3: memref<128x128xf32, #tpu.memory_space<vmem>>, %arg4: memref<128x128xf32, #tpu.memory_space<vmem>>, %arg5: memref<1x128xf32, #tpu.memory_space<vmem>>, %arg6: memref<1x128xf32, #tpu.memory_space<vmem>>, %arg7: memref<1x128xf32, #tpu.memory_space<vmem>>, %arg8: memref<128x128xf32, #tpu.memory_space<vmem>>, %arg9: memref<128x128xf32, #tpu.memory_space<vmem>>, %arg10: memref<128x128xf32, #tpu.memory_space<vmem>>, %arg11: memref<1x128xf32, #tpu.memory_space<vmem>>, %arg12: memref<1x128xf32, #tpu.memory_space<vmem>>, %arg13: memref<1x128xf32, #tpu.memory_space<vmem>>, %arg14: memref<128x128xf32, #tpu.memory_space<vmem>>, %arg15: memref<128x128xf32, #tpu.memory_space<vmem>>, %arg16: memref<128x128xf32, #tpu.memory_space<vmem>>, %arg17: memref<1x128xf32, #tpu.memory_space<vmem>>, %arg18: memref<1x128xf32, #tpu.memory_space<vmem>>, %arg19: memref<1x128xf32, #tpu.memory_space<vmem>>, %arg20: memref<8x128xf32, #tpu.memory_space<vmem>>) attributes {dimension_semantics = [#tpu.dimension_semantics<parallel>], iteration_bounds = array<i64: 1>, scalar_prefetch = 0 : i64, scratch_operands = 0 : i64, tpu.core_type = #tpu.core_type<tc>, window_params = [{transform_indices = @transform_0, window_bounds = array<i64: 8, 128>}, {pipeline_mode = #tpu.pipeline_mode<synchronous>, transform_indices = @transform_1, window_bounds = array<i64: 128, 128>}, {pipeline_mode = #tpu.pipeline_mode<synchronous>, transform_indices = @transform_2, window_bounds = array<i64: 128, 128>}, {pipeline_mode = #tpu.pipeline_mode<synchronous>, transform_indices = @transform_3, window_bounds = array<i64: 128, 128>}, {pipeline_mode = #tpu.pipeline_mode<synchronous>, transform_indices = @transform_4, window_bounds = array<i64: 1, 128>}, {pipeline_mode = #tpu.pipeline_mode<synchronous>, transform_indices = @transform_5, window_bounds = array<i64: 1, 128>}, {pipeline_mode = #tpu.pipeline_mode<synchronous>, transform_indices = @transform_6, window_bounds = array<i64: 1, 128>}, {pipeline_mode = #tpu.pipeline_mode<synchronous>, transform_indices = @transform_7, window_bounds = array<i64: 128, 128>}, {pipeline_mode = #tpu.pipeline_mode<synchronous>, transform_indices = @transform_8, window_bounds = array<i64: 128, 128>}, {pipeline_mode = #tpu.pipeline_mode<synchronous>, transform_indices = @transform_9, window_bounds = array<i64: 128, 128>}, {pipeline_mode = #tpu.pipeline_mode<synchronous>, transform_indices = @transform_10, window_bounds = array<i64: 1, 128>}, {pipeline_mode = #tpu.pipeline_mode<synchronous>, transform_indices = @transform_11, window_bounds = array<i64: 1, 128>}, {pipeline_mode = #tpu.pipeline_mode<synchronous>, transform_indices = @transform_12, window_bounds = array<i64: 1, 128>}, {pipeline_mode = #tpu.pipeline_mode<synchronous>, transform_indices = @transform_13, window_bounds = array<i64: 128, 128>}, {pipeline_mode = #tpu.pipeline_mode<synchronous>, transform_indices = @transform_14, window_bounds = array<i64: 128, 128>}, {pipeline_mode = #tpu.pipeline_mode<synchronous>, transform_indices = @transform_15, window_bounds = array<i64: 128, 128>}, {pipeline_mode = #tpu.pipeline_mode<synchronous>, transform_indices = @transform_16, window_bounds = array<i64: 1, 128>}, {pipeline_mode = #tpu.pipeline_mode<synchronous>, transform_indices = @transform_17, window_bounds = array<i64: 1, 128>}, {pipeline_mode = #tpu.pipeline_mode<synchronous>, transform_indices = @transform_18, window_bounds = array<i64: 1, 128>}, {transform_indices = @transform_19, window_bounds = array<i64: 8, 128>}]} {
    %c0 = arith.constant 0 : index
    %c0_0 = arith.constant 0 : index
    %0 = vector.load %arg1[%c0, %c0_0] : memref<8x128xf32, #tpu.memory_space<vmem>>, vector<8x128xf32>
    %c0_1 = arith.constant 0 : index
    %c0_2 = arith.constant 0 : index
    %1 = vector.load %arg2[%c0_1, %c0_2] : memref<128x128xf32, #tpu.memory_space<vmem>>, vector<128x128xf32>
    %c0_3 = arith.constant 0 : index
    %c0_4 = arith.constant 0 : index
    %2 = vector.load %arg3[%c0_3, %c0_4] : memref<128x128xf32, #tpu.memory_space<vmem>>, vector<128x128xf32>
    %cst = arith.constant 0.000000e+00 : f32
    %3 = vector.broadcast %cst : f32 to vector<128x128xf32>
    %4 = arith.maximumf %3, %2 : vector<128x128xf32>
    %5 = vector.broadcast %cst : f32 to vector<128x128xf32>
    %6 = arith.subf %5, %2 : vector<128x128xf32>
    %7 = arith.cmpf one, %6, %6 : vector<128x128xf32>
    %8 = vector.broadcast %cst : f32 to vector<128x128xf32>
    %9 = arith.addf %8, %2 : vector<128x128xf32>
    %10 = math.absf %6 : vector<128x128xf32>
    %cst_5 = arith.constant 0.000000e+00 : f32
    %11 = vector.broadcast %cst_5 : f32 to vector<128x128xf32>
    %12 = arith.subf %11, %10 : vector<128x128xf32>
    %13 = math.exp %12 : vector<128x128xf32>
    %14 = math.log1p %13 : vector<128x128xf32>
    %15 = arith.addf %4, %14 : vector<128x128xf32>
    %16 = arith.select %7, %9, %15 : vector<128x128xi1>, vector<128x128xf32>
    %c0_6 = arith.constant 0 : index
    %c0_7 = arith.constant 0 : index
    %17 = vector.load %arg4[%c0_6, %c0_7] : memref<128x128xf32, #tpu.memory_space<vmem>>, vector<128x128xf32>
    %18 = arith.mulf %16, %17 : vector<128x128xf32>
    %19 = arith.addf %1, %18 : vector<128x128xf32>
    %c0_8 = arith.constant 0 : index
    %c0_9 = arith.constant 0 : index
    %20 = vector.load %arg5[%c0_8, %c0_9] : memref<1x128xf32, #tpu.memory_space<vmem>>, vector<1x128xf32>
    %c0_10 = arith.constant 0 : index
    %c0_11 = arith.constant 0 : index
    %21 = vector.load %arg6[%c0_10, %c0_11] : memref<1x128xf32, #tpu.memory_space<vmem>>, vector<1x128xf32>
    %cst_12 = arith.constant 0.000000e+00 : f32
    %22 = vector.broadcast %cst_12 : f32 to vector<1x128xf32>
    %23 = arith.maximumf %22, %21 : vector<1x128xf32>
    %24 = vector.broadcast %cst_12 : f32 to vector<1x128xf32>
    %25 = arith.subf %24, %21 : vector<1x128xf32>
    %26 = arith.cmpf one, %25, %25 : vector<1x128xf32>
    %27 = vector.broadcast %cst_12 : f32 to vector<1x128xf32>
    %28 = arith.addf %27, %21 : vector<1x128xf32>
    %29 = math.absf %25 : vector<1x128xf32>
    %cst_13 = arith.constant 0.000000e+00 : f32
    %30 = vector.broadcast %cst_13 : f32 to vector<1x128xf32>
    %31 = arith.subf %30, %29 : vector<1x128xf32>
    %32 = math.exp %31 : vector<1x128xf32>
    %33 = math.log1p %32 : vector<1x128xf32>
    %34 = arith.addf %23, %33 : vector<1x128xf32>
    %35 = arith.select %26, %28, %34 : vector<1x128xi1>, vector<1x128xf32>
    %c0_14 = arith.constant 0 : index
    %c0_15 = arith.constant 0 : index
    %36 = vector.load %arg7[%c0_14, %c0_15] : memref<1x128xf32, #tpu.memory_space<vmem>>, vector<1x128xf32>
    %37 = arith.mulf %35, %36 : vector<1x128xf32>
    %38 = arith.addf %20, %37 : vector<1x128xf32>
    %39 = arith.truncf %0 : vector<8x128xf32> to vector<8x128xbf16>
    %40 = arith.truncf %19 : vector<128x128xf32> to vector<128x128xbf16>
    %cst_16 = arith.constant dense<0.000000e+00> : vector<8x128xf32>
    %41 = tpu.matmul %39, %40, %cst_16 {dimension_numbers = #tpu.dot_dimension_numbers<[1], [0], [0], [1], [0, 0, 1, 1], [], []>} : vector<8x128xbf16>, vector<128x128xbf16>, vector<8x128xf32> -> vector<8x128xf32>
    %42 = vector.broadcast %38 : vector<1x128xf32> to vector<8x128xf32>
    %43 = arith.addf %41, %42 : vector<8x128xf32>
    %44 = math.tanh %43 : vector<8x128xf32>
    %c0_17 = arith.constant 0 : index
    %c0_18 = arith.constant 0 : index
    %45 = vector.load %arg8[%c0_17, %c0_18] : memref<128x128xf32, #tpu.memory_space<vmem>>, vector<128x128xf32>
    %c0_19 = arith.constant 0 : index
    %c0_20 = arith.constant 0 : index
    %46 = vector.load %arg9[%c0_19, %c0_20] : memref<128x128xf32, #tpu.memory_space<vmem>>, vector<128x128xf32>
    %cst_21 = arith.constant 0.000000e+00 : f32
    %47 = vector.broadcast %cst_21 : f32 to vector<128x128xf32>
    %48 = arith.maximumf %47, %46 : vector<128x128xf32>
    %49 = vector.broadcast %cst_21 : f32 to vector<128x128xf32>
    %50 = arith.subf %49, %46 : vector<128x128xf32>
    %51 = arith.cmpf one, %50, %50 : vector<128x128xf32>
    %52 = vector.broadcast %cst_21 : f32 to vector<128x128xf32>
    %53 = arith.addf %52, %46 : vector<128x128xf32>
    %54 = math.absf %50 : vector<128x128xf32>
    %cst_22 = arith.constant 0.000000e+00 : f32
    %55 = vector.broadcast %cst_22 : f32 to vector<128x128xf32>
    %56 = arith.subf %55, %54 : vector<128x128xf32>
    %57 = math.exp %56 : vector<128x128xf32>
    %58 = math.log1p %57 : vector<128x128xf32>
    %59 = arith.addf %48, %58 : vector<128x128xf32>
    %60 = arith.select %51, %53, %59 : vector<128x128xi1>, vector<128x128xf32>
    %c0_23 = arith.constant 0 : index
    %c0_24 = arith.constant 0 : index
    %61 = vector.load %arg10[%c0_23, %c0_24] : memref<128x128xf32, #tpu.memory_space<vmem>>, vector<128x128xf32>
    %62 = arith.mulf %60, %61 : vector<128x128xf32>
    %63 = arith.addf %45, %62 : vector<128x128xf32>
    %c0_25 = arith.constant 0 : index
    %c0_26 = arith.constant 0 : index
    %64 = vector.load %arg11[%c0_25, %c0_26] : memref<1x128xf32, #tpu.memory_space<vmem>>, vector<1x128xf32>
    %c0_27 = arith.constant 0 : index
    %c0_28 = arith.constant 0 : index
    %65 = vector.load %arg12[%c0_27, %c0_28] : memref<1x128xf32, #tpu.memory_space<vmem>>, vector<1x128xf32>
    %cst_29 = arith.constant 0.000000e+00 : f32
    %66 = vector.broadcast %cst_29 : f32 to vector<1x128xf32>
    %67 = arith.maximumf %66, %65 : vector<1x128xf32>
    %68 = vector.broadcast %cst_29 : f32 to vector<1x128xf32>
    %69 = arith.subf %68, %65 : vector<1x128xf32>
    %70 = arith.cmpf one, %69, %69 : vector<1x128xf32>
    %71 = vector.broadcast %cst_29 : f32 to vector<1x128xf32>
    %72 = arith.addf %71, %65 : vector<1x128xf32>
    %73 = math.absf %69 : vector<1x128xf32>
    %cst_30 = arith.constant 0.000000e+00 : f32
    %74 = vector.broadcast %cst_30 : f32 to vector<1x128xf32>
    %75 = arith.subf %74, %73 : vector<1x128xf32>
    %76 = math.exp %75 : vector<1x128xf32>
    %77 = math.log1p %76 : vector<1x128xf32>
    %78 = arith.addf %67, %77 : vector<1x128xf32>
    %79 = arith.select %70, %72, %78 : vector<1x128xi1>, vector<1x128xf32>
    %c0_31 = arith.constant 0 : index
    %c0_32 = arith.constant 0 : index
    %80 = vector.load %arg13[%c0_31, %c0_32] : memref<1x128xf32, #tpu.memory_space<vmem>>, vector<1x128xf32>
    %81 = arith.mulf %79, %80 : vector<1x128xf32>
    %82 = arith.addf %64, %81 : vector<1x128xf32>
    %83 = arith.truncf %44 : vector<8x128xf32> to vector<8x128xbf16>
    %84 = arith.truncf %63 : vector<128x128xf32> to vector<128x128xbf16>
    %cst_33 = arith.constant dense<0.000000e+00> : vector<8x128xf32>
    %85 = tpu.matmul %83, %84, %cst_33 {dimension_numbers = #tpu.dot_dimension_numbers<[1], [0], [0], [1], [0, 0, 1, 1], [], []>} : vector<8x128xbf16>, vector<128x128xbf16>, vector<8x128xf32> -> vector<8x128xf32>
    %86 = vector.broadcast %82 : vector<1x128xf32> to vector<8x128xf32>
    %87 = arith.addf %85, %86 : vector<8x128xf32>
    %88 = math.tanh %87 : vector<8x128xf32>
    %c0_34 = arith.constant 0 : index
    %c0_35 = arith.constant 0 : index
    %89 = vector.load %arg14[%c0_34, %c0_35] : memref<128x128xf32, #tpu.memory_space<vmem>>, vector<128x128xf32>
    %c0_36 = arith.constant 0 : index
    %c0_37 = arith.constant 0 : index
    %90 = vector.load %arg15[%c0_36, %c0_37] : memref<128x128xf32, #tpu.memory_space<vmem>>, vector<128x128xf32>
    %cst_38 = arith.constant 0.000000e+00 : f32
    %91 = vector.broadcast %cst_38 : f32 to vector<128x128xf32>
    %92 = arith.maximumf %91, %90 : vector<128x128xf32>
    %93 = vector.broadcast %cst_38 : f32 to vector<128x128xf32>
    %94 = arith.subf %93, %90 : vector<128x128xf32>
    %95 = arith.cmpf one, %94, %94 : vector<128x128xf32>
    %96 = vector.broadcast %cst_38 : f32 to vector<128x128xf32>
    %97 = arith.addf %96, %90 : vector<128x128xf32>
    %98 = math.absf %94 : vector<128x128xf32>
    %cst_39 = arith.constant 0.000000e+00 : f32
    %99 = vector.broadcast %cst_39 : f32 to vector<128x128xf32>
    %100 = arith.subf %99, %98 : vector<128x128xf32>
    %101 = math.exp %100 : vector<128x128xf32>
    %102 = math.log1p %101 : vector<128x128xf32>
    %103 = arith.addf %92, %102 : vector<128x128xf32>
    %104 = arith.select %95, %97, %103 : vector<128x128xi1>, vector<128x128xf32>
    %c0_40 = arith.constant 0 : index
    %c0_41 = arith.constant 0 : index
    %105 = vector.load %arg16[%c0_40, %c0_41] : memref<128x128xf32, #tpu.memory_space<vmem>>, vector<128x128xf32>
    %106 = arith.mulf %104, %105 : vector<128x128xf32>
    %107 = arith.addf %89, %106 : vector<128x128xf32>
    %c0_42 = arith.constant 0 : index
    %c0_43 = arith.constant 0 : index
    %108 = vector.load %arg17[%c0_42, %c0_43] : memref<1x128xf32, #tpu.memory_space<vmem>>, vector<1x128xf32>
    %c0_44 = arith.constant 0 : index
    %c0_45 = arith.constant 0 : index
    %109 = vector.load %arg18[%c0_44, %c0_45] : memref<1x128xf32, #tpu.memory_space<vmem>>, vector<1x128xf32>
    %cst_46 = arith.constant 0.000000e+00 : f32
    %110 = vector.broadcast %cst_46 : f32 to vector<1x128xf32>
    %111 = arith.maximumf %110, %109 : vector<1x128xf32>
    %112 = vector.broadcast %cst_46 : f32 to vector<1x128xf32>
    %113 = arith.subf %112, %109 : vector<1x128xf32>
    %114 = arith.cmpf one, %113, %113 : vector<1x128xf32>
    %115 = vector.broadcast %cst_46 : f32 to vector<1x128xf32>
    %116 = arith.addf %115, %109 : vector<1x128xf32>
    %117 = math.absf %113 : vector<1x128xf32>
    %cst_47 = arith.constant 0.000000e+00 : f32
    %118 = vector.broadcast %cst_47 : f32 to vector<1x128xf32>
    %119 = arith.subf %118, %117 : vector<1x128xf32>
    %120 = math.exp %119 : vector<1x128xf32>
    %121 = math.log1p %120 : vector<1x128xf32>
    %122 = arith.addf %111, %121 : vector<1x128xf32>
    %123 = arith.select %114, %116, %122 : vector<1x128xi1>, vector<1x128xf32>
    %c0_48 = arith.constant 0 : index
    %c0_49 = arith.constant 0 : index
    %124 = vector.load %arg19[%c0_48, %c0_49] : memref<1x128xf32, #tpu.memory_space<vmem>>, vector<1x128xf32>
    %125 = arith.mulf %123, %124 : vector<1x128xf32>
    %126 = arith.addf %108, %125 : vector<1x128xf32>
    %127 = arith.truncf %88 : vector<8x128xf32> to vector<8x128xbf16>
    %128 = arith.truncf %107 : vector<128x128xf32> to vector<128x128xbf16>
    %cst_50 = arith.constant dense<0.000000e+00> : vector<8x128xf32>
    %129 = tpu.matmul %127, %128, %cst_50 {dimension_numbers = #tpu.dot_dimension_numbers<[1], [0], [0], [1], [0, 0, 1, 1], [], []>} : vector<8x128xbf16>, vector<128x128xbf16>, vector<8x128xf32> -> vector<8x128xf32>
    %130 = vector.broadcast %126 : vector<1x128xf32> to vector<8x128xf32>
    %131 = arith.addf %129, %130 : vector<8x128xf32>
    %c0_51 = arith.constant 0 : index
    %c0_52 = arith.constant 0 : index
    %132 = vector.load %arg20[%c0_51, %c0_52] : memref<8x128xf32, #tpu.memory_space<vmem>>, vector<8x128xf32>
    tpu.vector_store %arg20[%c0_51, %c0_52], %131 {strides = array<i32>} : memref<8x128xf32, #tpu.memory_space<vmem>>, vector<8x128xf32>,
    return
  }
  func.func @transform_0(%arg0: i32) -> (i32, i32) {
    %c0_i32 = arith.constant 0 : i32
    %c0_i32_0 = arith.constant 0 : i32
    return %arg0, %c0_i32 : i32, i32
  }
  func.func @transform_1(%arg0: i32) -> (i32, i32) {
    %c0_i32 = arith.constant 0 : i32
    %c0_i32_0 = arith.constant 0 : i32
    %c0_i32_1 = arith.constant 0 : i32
    return %c0_i32, %c0_i32_0 : i32, i32
  }
  func.func @transform_2(%arg0: i32) -> (i32, i32) {
    %c0_i32 = arith.constant 0 : i32
    %c0_i32_0 = arith.constant 0 : i32
    %c0_i32_1 = arith.constant 0 : i32
    return %c0_i32, %c0_i32_0 : i32, i32
  }
  func.func @transform_3(%arg0: i32) -> (i32, i32) {
    %c0_i32 = arith.constant 0 : i32
    %c0_i32_0 = arith.constant 0 : i32
    %c0_i32_1 = arith.constant 0 : i32
    return %c0_i32, %c0_i32_0 : i32, i32
  }
  func.func @transform_4(%arg0: i32) -> (i32, i32) {
    %c0_i32 = arith.constant 0 : i32
    %c0_i32_0 = arith.constant 0 : i32
    %c0_i32_1 = arith.constant 0 : i32
    return %c0_i32, %c0_i32_0 : i32, i32
  }
  func.func @transform_5(%arg0: i32) -> (i32, i32) {
    %c0_i32 = arith.constant 0 : i32
    %c0_i32_0 = arith.constant 0 : i32
    %c0_i32_1 = arith.constant 0 : i32
    return %c0_i32, %c0_i32_0 : i32, i32
  }
  func.func @transform_6(%arg0: i32) -> (i32, i32) {
    %c0_i32 = arith.constant 0 : i32
    %c0_i32_0 = arith.constant 0 : i32
    %c0_i32_1 = arith.constant 0 : i32
    return %c0_i32, %c0_i32_0 : i32, i32
  }
  func.func @transform_7(%arg0: i32) -> (i32, i32) {
    %c0_i32 = arith.constant 0 : i32
    %c0_i32_0 = arith.constant 0 : i32
    %c0_i32_1 = arith.constant 0 : i32
    return %c0_i32, %c0_i32_0 : i32, i32
  }
  func.func @transform_8(%arg0: i32) -> (i32, i32) {
    %c0_i32 = arith.constant 0 : i32
    %c0_i32_0 = arith.constant 0 : i32
    %c0_i32_1 = arith.constant 0 : i32
    return %c0_i32, %c0_i32_0 : i32, i32
  }
  func.func @transform_9(%arg0: i32) -> (i32, i32) {
    %c0_i32 = arith.constant 0 : i32
    %c0_i32_0 = arith.constant 0 : i32
    %c0_i32_1 = arith.constant 0 : i32
    return %c0_i32, %c0_i32_0 : i32, i32
  }
  func.func @transform_10(%arg0: i32) -> (i32, i32) {
    %c0_i32 = arith.constant 0 : i32
    %c0_i32_0 = arith.constant 0 : i32
    %c0_i32_1 = arith.constant 0 : i32
    return %c0_i32, %c0_i32_0 : i32, i32
  }
  func.func @transform_11(%arg0: i32) -> (i32, i32) {
    %c0_i32 = arith.constant 0 : i32
    %c0_i32_0 = arith.constant 0 : i32
    %c0_i32_1 = arith.constant 0 : i32
    return %c0_i32, %c0_i32_0 : i32, i32
  }
  func.func @transform_12(%arg0: i32) -> (i32, i32) {
    %c0_i32 = arith.constant 0 : i32
    %c0_i32_0 = arith.constant 0 : i32
    %c0_i32_1 = arith.constant 0 : i32
    return %c0_i32, %c0_i32_0 : i32, i32
  }
  func.func @transform_13(%arg0: i32) -> (i32, i32) {
    %c0_i32 = arith.constant 0 : i32
    %c0_i32_0 = arith.constant 0 : i32
    %c0_i32_1 = arith.constant 0 : i32
    return %c0_i32, %c0_i32_0 : i32, i32
  }
  func.func @transform_14(%arg0: i32) -> (i32, i32) {
    %c0_i32 = arith.constant 0 : i32
    %c0_i32_0 = arith.constant 0 : i32
    %c0_i32_1 = arith.constant 0 : i32
    return %c0_i32, %c0_i32_0 : i32, i32
  }
  func.func @transform_15(%arg0: i32) -> (i32, i32) {
    %c0_i32 = arith.constant 0 : i32
    %c0_i32_0 = arith.constant 0 : i32
    %c0_i32_1 = arith.constant 0 : i32
    return %c0_i32, %c0_i32_0 : i32, i32
  }
  func.func @transform_16(%arg0: i32) -> (i32, i32) {
    %c0_i32 = arith.constant 0 : i32
    %c0_i32_0 = arith.constant 0 : i32
    %c0_i32_1 = arith.constant 0 : i32
    return %c0_i32, %c0_i32_0 : i32, i32
  }
  func.func @transform_17(%arg0: i32) -> (i32, i32) {
    %c0_i32 = arith.constant 0 : i32
    %c0_i32_0 = arith.constant 0 : i32
    %c0_i32_1 = arith.constant 0 : i32
    return %c0_i32, %c0_i32_0 : i32, i32
  }
  func.func @transform_18(%arg0: i32) -> (i32, i32) {
    %c0_i32 = arith.constant 0 : i32
    %c0_i32_0 = arith.constant 0 : i32
    %c0_i32_1 = arith.constant 0 : i32
    return %c0_i32, %c0_i32_0 : i32, i32
  }
  func.func @transform_19(%arg0: i32) -> (i32, i32) {
    %c0_i32 = arith.constant 0 : i32
    %c0_i32_0 = arith.constant 0 : i32
    return %arg0, %c0_i32 : i32, i32
  }
}

</mosaic_0001>

<llo_original>
// kernel: tpu_custom_call.1
$region0: #{tpu_custom_call.1}
  #allocation0 [shape = 'u32[]', space=smem, size = 0x4, offset = 0x4, fixed_abs, tag = 'smem constant byte address 0x4 - core index']
  #allocation1 [shape = 'u32[144,128]{1,0:T(1,128)}', space=vmem, size = 0x12000, scoped, tag = 'internal scratch']
  %s0 = inlined_call_operand.hbm [shape: f32[8,128], index: 0, kind: input, shape index: {}]
  %s1 = inlined_call_operand.hbm [shape: f32[128,128], index: 1, kind: input, shape index: {}]
  %s2 = inlined_call_operand.hbm [shape: f32[128,128], index: 2, kind: input, shape index: {}]
  %s3 = inlined_call_operand.hbm [shape: f32[128,128], index: 3, kind: input, shape index: {}]
  %s4 = inlined_call_operand.vmem [shape: f32[1,128], index: 4, kind: input, shape index: {}]
  %s5 = inlined_call_operand.vmem [shape: f32[1,128], index: 5, kind: input, shape index: {}]
  %s6 = inlined_call_operand.vmem [shape: f32[1,128], index: 6, kind: input, shape index: {}]
  %s7 = inlined_call_operand.hbm [shape: f32[128,128], index: 7, kind: input, shape index: {}]
  %s8 = inlined_call_operand.hbm [shape: f32[128,128], index: 8, kind: input, shape index: {}]
  %s9 = inlined_call_operand.hbm [shape: f32[128,128], index: 9, kind: input, shape index: {}]
  %s10 = inlined_call_operand.vmem [shape: f32[1,128], index: 10, kind: input, shape index: {}]
  %s11 = inlined_call_operand.vmem [shape: f32[1,128], index: 11, kind: input, shape index: {}]
  %s12 = inlined_call_operand.vmem [shape: f32[1,128], index: 12, kind: input, shape index: {}]
  %s13 = inlined_call_operand.hbm [shape: f32[128,128], index: 13, kind: input, shape index: {}]
  %s14 = inlined_call_operand.hbm [shape: f32[128,128], index: 14, kind: input, shape index: {}]
  %s15 = inlined_call_operand.hbm [shape: f32[128,128], index: 15, kind: input, shape index: {}]
  %s16 = inlined_call_operand.vmem [shape: f32[1,128], index: 16, kind: input, shape index: {}]
  %s17 = inlined_call_operand.vmem [shape: f32[1,128], index: 17, kind: input, shape index: {}]
  %s18 = inlined_call_operand.vmem [shape: f32[1,128], index: 18, kind: input, shape index: {}]
  %s19 = inlined_call_operand.hbm [shape: f32[8,128], index: 19, kind: output, shape index: {}]
  %s20 = sld [smem:[#allocation0]]
  $region126: #{tpu_custom_call.1} parent=0
    _
  %s22 = ssub.s32 1, %s20
  %s23 = scalar_select 0, %s22, %s20
  $region1: #{tpu_custom_call.1} parent=0
    #allocation2 [shape = 'u8[4096]{0}', space=vmem, size = 0x1000, scoped, tag = 'input window, operand 0, single buffered']
    #allocation3 [shape = 's32[1]{0}', space=sflag, size = 0x4, scoped, tag = 'scoped memory for tpu_custom_call.1']
    #allocation4 [shape = 's32[1]{0}', space=sflag, size = 0x4, scoped, tag = 'scoped memory for tpu_custom_call.1']
    #allocation5 [shape = 'u8[65536]{0}', space=vmem, size = 0x10000, scoped, tag = 'input window, operand 1, single buffered']
    #allocation6 [shape = 's32[1]{0}', space=sflag, size = 0x4, scoped, tag = 'scoped memory for tpu_custom_call.1']
    #allocation7 [shape = 'u8[65536]{0}', space=vmem, size = 0x10000, scoped, tag = 'input window, operand 2, single buffered']
    #allocation8 [shape = 'u8[65536]{0}', space=vmem, size = 0x10000, scoped, tag = 'input window, operand 3, single buffered']
    #allocation9 [shape = 's32[1]{0}', space=sflag, size = 0x4, scoped, tag = 'scoped memory for tpu_custom_call.1']
    #allocation10 [shape = 'u8[65536]{0}', space=vmem, size = 0x10000, scoped, tag = 'input window, operand 7, single buffered']
    #allocation11 [shape = 'u8[65536]{0}', space=vmem, size = 0x10000, scoped, tag = 'input window, operand 8, single buffered']
    #allocation12 [shape = 's32[1]{0}', space=sflag, size = 0x4, scoped, tag = 'scoped memory for tpu_custom_call.1']
    #allocation13 [shape = 'u8[65536]{0}', space=vmem, size = 0x10000, scoped, tag = 'input window, operand 9, single buffered']
    #allocation14 [shape = 'u8[65536]{0}', space=vmem, size = 0x10000, scoped, tag = 'input window, operand 13, single buffered']
    #allocation15 [shape = 's32[1]{0}', space=sflag, size = 0x4, scoped, tag = 'scoped memory for tpu_custom_call.1']
    #allocation16 [shape = 'u8[65536]{0}', space=vmem, size = 0x10000, scoped, tag = 'input window, operand 14, single buffered']
    #allocation17 [shape = 'u8[65536]{0}', space=vmem, size = 0x10000, scoped, tag = 'input window, operand 15, single buffered']
    #allocation18 [shape = 's32[1]{0}', space=sflag, size = 0x4, scoped, tag = 'scoped memory for tpu_custom_call.1']
    #allocation19 [shape = 'u8[4096]{0}', space=vmem, size = 0x1000, scoped, tag = 'output window, operand 0, single buffered']
    %24 = vsyncpa [#allocation3], 0
    %25 = vsyncpa [#allocation6], 0
    %26 = vsyncpa [#allocation9], 0
    %27 = vsyncpa [#allocation12], 0
    %28 = vsyncpa [#allocation15], 0
    %29 = vsyncpa [#allocation18], 0
    %30 = vsyncpa [#allocation4], 0
    // Predicated region
    $region2: #{tpu_custom_call.1} parent=1 // pred_check
      _
    $region3: #{tpu_custom_call.1} parent=1 // pred_check_branch
      %32 = sbr.rel (0) target = $region5
    $region4: #{tpu_custom_call.1} parent=1 // pred_region
      %s34 = ssub.s32 128, 128
      %35 = vsyncadd [#allocation3], %s34
      %s37 = sshll.u32 [#allocation2], 4
      %s38 = int_to_ptr.vmem [resolvable:$true] %s37
      %40 = dma.hbm_to_vmem [thread:$0]  %s0, 128, %s38, [#allocation3]
    $region5: #{tpu_custom_call.1} parent=1 // pred_fallthru
      _
    // Predicated region
    $region6: #{tpu_custom_call.1} parent=1 // pred_check
      _
    $region7: #{tpu_custom_call.1} parent=1 // pred_check_branch
      %42 = sbr.rel (0) target = $region9
    $region8: #{tpu_custom_call.1} parent=1 // pred_region
      %s44 = ssub.s32 2048, 2048
      %45 = vsyncadd [#allocation6], %s44
      %s46 = sshll.u32 [#allocation5], 4
      %s47 = int_to_ptr.vmem [resolvable:$true] %s46
      %52 = dma.hbm_to_vmem [thread:$0]  %s1, 2048, %s47, [#allocation6], 128, 128, 8
    $region9: #{tpu_custom_call.1} parent=1 // pred_fallthru
      _
    // Predicated region
    $region10: #{tpu_custom_call.1} parent=1 // pred_check
      _
    $region11: #{tpu_custom_call.1} parent=1 // pred_check_branch
      %54 = sbr.rel (0) target = $region13
    $region12: #{tpu_custom_call.1} parent=1 // pred_region
      %s56 = ssub.s32 2048, 2048
      %57 = vsyncadd [#allocation6], %s56
      %s58 = sshll.u32 [#allocation7], 4
      %s59 = int_to_ptr.vmem [resolvable:$true] %s58
      %64 = dma.hbm_to_vmem [thread:$0]  %s2, 2048, %s59, [#allocation6], 128, 128, 8
    $region13: #{tpu_custom_call.1} parent=1 // pred_fallthru
      _
    // Predicated region
    $region14: #{tpu_custom_call.1} parent=1 // pred_check
      _
    $region15: #{tpu_custom_call.1} parent=1 // pred_check_branch
      %66 = sbr.rel (0) target = $region17
    $region16: #{tpu_custom_call.1} parent=1 // pred_region
      %s68 = ssub.s32 2048, 2048
      %69 = vsyncadd [#allocation9], %s68
      %s70 = sshll.u32 [#allocation8], 4
      %s71 = int_to_ptr.vmem [resolvable:$true] %s70
      %76 = dma.hbm_to_vmem [thread:$0]  %s3, 2048, %s71, [#allocation9], 128, 128, 8
    $region17: #{tpu_custom_call.1} parent=1 // pred_fallthru
      _
    // Predicated region
    $region18: #{tpu_custom_call.1} parent=1 // pred_check
      _
    $region19: #{tpu_custom_call.1} parent=1 // pred_check_branch
      %78 = sbr.rel (0) target = $region21
    $region20: #{tpu_custom_call.1} parent=1 // pred_region
      _
    $region21: #{tpu_custom_call.1} parent=1 // pred_fallthru
      _
    // Predicated region
    $region22: #{tpu_custom_call.1} parent=1 // pred_check
      _
    $region23: #{tpu_custom_call.1} parent=1 // pred_check_branch
      %80 = sbr.rel (0) target = $region25
    $region24: #{tpu_custom_call.1} parent=1 // pred_region
      _
    $region25: #{tpu_custom_call.1} parent=1 // pred_fallthru
      _
    // Predicated region
    $region26: #{tpu_custom_call.1} parent=1 // pred_check
      _
    $region27: #{tpu_custom_call.1} parent=1 // pred_check_branch
      %82 = sbr.rel (0) target = $region29
    $region28: #{tpu_custom_call.1} parent=1 // pred_region
      _
    $region29: #{tpu_custom_call.1} parent=1 // pred_fallthru
      _
    // Predicated region
    $region30: #{tpu_custom_call.1} parent=1 // pred_check
      _
    $region31: #{tpu_custom_call.1} parent=1 // pred_check_branch
      %84 = sbr.rel (0) target = $region33
    $region32: #{tpu_custom_call.1} parent=1 // pred_region
      %s86 = ssub.s32 2048, 2048
      %87 = vsyncadd [#allocation9], %s86
      %s88 = sshll.u32 [#allocation10], 4
      %s89 = int_to_ptr.vmem [resolvable:$true] %s88
      %94 = dma.hbm_to_vmem [thread:$0]  %s7, 2048, %s89, [#allocation9], 128, 128, 8
    $region33: #{tpu_custom_call.1} parent=1 // pred_fallthru
      _
    // Predicated region
    $region34: #{tpu_custom_call.1} parent=1 // pred_check
      _
    $region35: #{tpu_custom_call.1} parent=1 // pred_check_branch
      %96 = sbr.rel (0) target = $region37
    $region36: #{tpu_custom_call.1} parent=1 // pred_region
      %s98 = ssub.s32 2048, 2048
      %99 = vsyncadd [#allocation12], %s98
      %s100 = sshll.u32 [#allocation11], 4
      %s101 = int_to_ptr.vmem [resolvable:$true] %s100
      %106 = dma.hbm_to_vmem [thread:$0]  %s8, 2048, %s101, [#allocation12], 128, 128, 8
    $region37: #{tpu_custom_call.1} parent=1 // pred_fallthru
      _
    // Predicated region
    $region38: #{tpu_custom_call.1} parent=1 // pred_check
      _
    $region39: #{tpu_custom_call.1} parent=1 // pred_check_branch
      %108 = sbr.rel (0) target = $region41
    $region40: #{tpu_custom_call.1} parent=1 // pred_region
      %s110 = ssub.s32 2048, 2048
      %111 = vsyncadd [#allocation12], %s110
      %s112 = sshll.u32 [#allocation13], 4
      %s113 = int_to_ptr.vmem [resolvable:$true] %s112
      %118 = dma.hbm_to_vmem [thread:$0]  %s9, 2048, %s113, [#allocation12], 128, 128, 8
    $region41: #{tpu_custom_call.1} parent=1 // pred_fallthru
      _
    // Predicated region
    $region42: #{tpu_custom_call.1} parent=1 // pred_check
      _
    $region43: #{tpu_custom_call.1} parent=1 // pred_check_branch
      %120 = sbr.rel (0) target = $region45
    $region44: #{tpu_custom_call.1} parent=1 // pred_region
      _
    $region45: #{tpu_custom_call.1} parent=1 // pred_fallthru
      _
    // Predicated region
    $region46: #{tpu_custom_call.1} parent=1 // pred_check
      _
    $region47: #{tpu_custom_call.1} parent=1 // pred_check_branch
      %122 = sbr.rel (0) target = $region49
    $region48: #{tpu_custom_call.1} parent=1 // pred_region
      _
    $region49: #{tpu_custom_call.1} parent=1 // pred_fallthru
      _
    // Predicated region
    $region50: #{tpu_custom_call.1} parent=1 // pred_check
      _
    $region51: #{tpu_custom_call.1} parent=1 // pred_check_branch
      %124 = sbr.rel (0) target = $region53
    $region52: #{tpu_custom_call.1} parent=1 // pred_region
      _
    $region53: #{tpu_custom_call.1} parent=1 // pred_fallthru
      _
    // Predicated region
    $region54: #{tpu_custom_call.1} parent=1 // pred_check
      _
    $region55: #{tpu_custom_call.1} parent=1 // pred_check_branch
      %126 = sbr.rel (0) target = $region57
    $region56: #{tpu_custom_call.1} parent=1 // pred_region
      %s128 = ssub.s32 2048, 2048
      %129 = vsyncadd [#allocation15], %s128
      %s130 = sshll.u32 [#allocation14], 4
      %s131 = int_to_ptr.vmem [resolvable:$true] %s130
      %136 = dma.hbm_to_vmem [thread:$0]  %s13, 2048, %s131, [#allocation15], 128, 128, 8
    $region57: #{tpu_custom_call.1} parent=1 // pred_fallthru
      _
    // Predicated region
    $region58: #{tpu_custom_call.1} parent=1 // pred_check
      _
    $region59: #{tpu_custom_call.1} parent=1 // pred_check_branch
      %138 = sbr.rel (0) target = $region61
    $region60: #{tpu_custom_call.1} parent=1 // pred_region
      %s140 = ssub.s32 2048, 2048
      %141 = vsyncadd [#allocation15], %s140
      %s142 = sshll.u32 [#allocation16], 4
      %s143 = int_to_ptr.vmem [resolvable:$true] %s142
      %148 = dma.hbm_to_vmem [thread:$0]  %s14, 2048, %s143, [#allocation15], 128, 128, 8
    $region61: #{tpu_custom_call.1} parent=1 // pred_fallthru
      _
    // Predicated region
    $region62: #{tpu_custom_call.1} parent=1 // pred_check
      _
    $region63: #{tpu_custom_call.1} parent=1 // pred_check_branch
      %150 = sbr.rel (0) target = $region65
    $region64: #{tpu_custom_call.1} parent=1 // pred_region
      %s152 = ssub.s32 2048, 2048
      %153 = vsyncadd [#allocation18], %s152
      %s154 = sshll.u32 [#allocation17], 4
      %s155 = int_to_ptr.vmem [resolvable:$true] %s154
      %160 = dma.hbm_to_vmem [thread:$0]  %s15, 2048, %s155, [#allocation18], 128, 128, 8
    $region65: #{tpu_custom_call.1} parent=1 // pred_fallthru
      _
    // Predicated region
    $region66: #{tpu_custom_call.1} parent=1 // pred_check
      _
    $region67: #{tpu_custom_call.1} parent=1 // pred_check_branch
      %162 = sbr.rel (0) target = $region69
    $region68: #{tpu_custom_call.1} parent=1 // pred_region
      _
    $region69: #{tpu_custom_call.1} parent=1 // pred_fallthru
      _
    // Predicated region
    $region70: #{tpu_custom_call.1} parent=1 // pred_check
      _
    $region71: #{tpu_custom_call.1} parent=1 // pred_check_branch
      %164 = sbr.rel (0) target = $region73
    $region72: #{tpu_custom_call.1} parent=1 // pred_region
      _
    $region73: #{tpu_custom_call.1} parent=1 // pred_fallthru
      _
    // Predicated region
    $region74: #{tpu_custom_call.1} parent=1 // pred_check
      _
    $region75: #{tpu_custom_call.1} parent=1 // pred_check_branch
      %166 = sbr.rel (0) target = $region77
    $region76: #{tpu_custom_call.1} parent=1 // pred_region
      _
    $region77: #{tpu_custom_call.1} parent=1 // pred_fallthru
      _
    // Predicated region
    $region78: #{tpu_custom_call.1} parent=1 // pred_check
      _
    $region79: #{tpu_custom_call.1} parent=1 // pred_check_branch
      %168 = sbr.rel (0) target = $region81
    $region80: #{tpu_custom_call.1} parent=1 // pred_region
      %169 = dma.done [#allocation3], 128
    $region81: #{tpu_custom_call.1} parent=1 // pred_fallthru
      _
    // Predicated region
    $region82: #{tpu_custom_call.1} parent=1 // pred_check
      _
    $region83: #{tpu_custom_call.1} parent=1 // pred_check_branch
      %171 = sbr.rel (0) target = $region85
    $region84: #{tpu_custom_call.1} parent=1 // pred_region
      %172 = dma.done [#allocation6], 2048
    $region85: #{tpu_custom_call.1} parent=1 // pred_fallthru
      _
    // Predicated region
    $region86: #{tpu_custom_call.1} parent=1 // pred_check
      _
    $region87: #{tpu_custom_call.1} parent=1 // pred_check_branch
      %174 = sbr.rel (0) target = $region89
    $region88: #{tpu_custom_call.1} parent=1 // pred_region
      %175 = dma.done [#allocation6], 2048
    $region89: #{tpu_custom_call.1} parent=1 // pred_fallthru
      _
    // Predicated region
    $region90: #{tpu_custom_call.1} parent=1 // pred_check
      _
    $region91: #{tpu_custom_call.1} parent=1 // pred_check_branch
      %177 = sbr.rel (0) target = $region93
    $region92: #{tpu_custom_call.1} parent=1 // pred_region
      %178 = dma.done [#allocation9], 2048
    $region93: #{tpu_custom_call.1} parent=1 // pred_fallthru
      _
    // Predicated region
    $region94: #{tpu_custom_call.1} parent=1 // pred_check
      _
    $region95: #{tpu_custom_call.1} parent=1 // pred_check_branch
      %180 = sbr.rel (0) target = $region97
    $region96: #{tpu_custom_call.1} parent=1 // pred_region
      %181 = dma.done [#allocation9], 2048
    $region97: #{tpu_custom_call.1} parent=1 // pred_fallthru
      _
    // Predicated region
    $region98: #{tpu_custom_call.1} parent=1 // pred_check
      _
    $region99: #{tpu_custom_call.1} parent=1 // pred_check_branch
      %183 = sbr.rel (0) target = $region101
    $region100: #{tpu_custom_call.1} parent=1 // pred_region
      %184 = dma.done [#allocation12], 2048
    $region101: #{tpu_custom_call.1} parent=1 // pred_fallthru
      _
    // Predicated region
    $region102: #{tpu_custom_call.1} parent=1 // pred_check
      _
    $region103: #{tpu_custom_call.1} parent=1 // pred_check_branch
      %186 = sbr.rel (0) target = $region105
    $region104: #{tpu_custom_call.1} parent=1 // pred_region
      %187 = dma.done [#allocation12], 2048
    $region105: #{tpu_custom_call.1} parent=1 // pred_fallthru
      _
    // Predicated region
    $region106: #{tpu_custom_call.1} parent=1 // pred_check
      _
    $region107: #{tpu_custom_call.1} parent=1 // pred_check_branch
      %189 = sbr.rel (0) target = $region109
    $region108: #{tpu_custom_call.1} parent=1 // pred_region
      %190 = dma.done [#allocation15], 2048
    $region109: #{tpu_custom_call.1} parent=1 // pred_fallthru
      _
    // Predicated region
    $region110: #{tpu_custom_call.1} parent=1 // pred_check
      _
    $region111: #{tpu_custom_call.1} parent=1 // pred_check_branch
      %192 = sbr.rel (0) target = $region113
    $region112: #{tpu_custom_call.1} parent=1 // pred_region
      %193 = dma.done [#allocation15], 2048
    $region113: #{tpu_custom_call.1} parent=1 // pred_fallthru
      _
    // Predicated region
    $region114: #{tpu_custom_call.1} parent=1 // pred_check
      _
    $region115: #{tpu_custom_call.1} parent=1 // pred_check_branch
      %195 = sbr.rel (0) target = $region117
    $region116: #{tpu_custom_call.1} parent=1 // pred_region
      %196 = dma.done [#allocation18], 2048
    $region117: #{tpu_custom_call.1} parent=1 // pred_fallthru
      _
    %v198 = vld [vmem:[#allocation2] sm:$0xff]
    %v199 = vld [vmem:[#allocation5] sm:$0xff]
    %v200 = vld [vmem:[#allocation5 + $0x8] sm:$0xff]
    %v201 = vld [vmem:[#allocation5 + $0x10] sm:$0xff]
    %v202 = vld [vmem:[#allocation5 + $0x18] sm:$0xff]
    %v203 = vld [vmem:[#allocation5 + $0x20] sm:$0xff]
    %v204 = vld [vmem:[#allocation5 + $0x28] sm:$0xff]
    %v205 = vld [vmem:[#allocation5 + $0x30] sm:$0xff]
    %v206 = vld [vmem:[#allocation5 + $0x38] sm:$0xff]
    %v207 = vld [vmem:[#allocation5 + $0x40] sm:$0xff]
    %v208 = vld [vmem:[#allocation5 + $0x48] sm:$0xff]
    %v209 = vld [vmem:[#allocation5 + $0x50] sm:$0xff]
    %v210 = vld [vmem:[#allocation5 + $0x58] sm:$0xff]
    %v211 = vld [vmem:[#allocation5 + $0x60] sm:$0xff]
    %v212 = vld [vmem:[#allocation5 + $0x68] sm:$0xff]
    %v213 = vld [vmem:[#allocation5 + $0x70] sm:$0xff]
    %v214 = vld [vmem:[#allocation5 + $0x78] sm:$0xff]
    %v215 = vld [vmem:[#allocation7] sm:$0xff]
    %v216 = vld [vmem:[#allocation7 + $0x8] sm:$0xff]
    %v217 = vld [vmem:[#allocation7 + $0x10] sm:$0xff]
    %v218 = vld [vmem:[#allocation7 + $0x18] sm:$0xff]
    %v219 = vld [vmem:[#allocation7 + $0x20] sm:$0xff]
    %v220 = vld [vmem:[#allocation7 + $0x28] sm:$0xff]
    %v221 = vld [vmem:[#allocation7 + $0x30] sm:$0xff]
    %v222 = vld [vmem:[#allocation7 + $0x38] sm:$0xff]
    %v223 = vld [vmem:[#allocation7 + $0x40] sm:$0xff]
    %v224 = vld [vmem:[#allocation7 + $0x48] sm:$0xff]
    %v225 = vld [vmem:[#allocation7 + $0x50] sm:$0xff]
    %v226 = vld [vmem:[#allocation7 + $0x58] sm:$0xff]
    %v227 = vld [vmem:[#allocation7 + $0x60] sm:$0xff]
    %v228 = vld [vmem:[#allocation7 + $0x68] sm:$0xff]
    %v229 = vld [vmem:[#allocation7 + $0x70] sm:$0xff]
    %v230 = vld [vmem:[#allocation7 + $0x78] sm:$0xff]
    %v231 = vmax.f32 %v215, 0.0
    %v232 = vmax.f32 %v216, 0.0
    %v233 = vmax.f32 %v217, 0.0
    %v234 = vmax.f32 %v218, 0.0
    %v235 = vmax.f32 %v219, 0.0
    %v236 = vmax.f32 %v220, 0.0
    %v237 = vmax.f32 %v221, 0.0
    %v238 = vmax.f32 %v222, 0.0
    %v239 = vmax.f32 %v223, 0.0
    %v240 = vmax.f32 %v224, 0.0
    %v241 = vmax.f32 %v225, 0.0
    %v242 = vmax.f32 %v226, 0.0
    %v243 = vmax.f32 %v227, 0.0
    %v244 = vmax.f32 %v228, 0.0
    %v245 = vmax.f32 %v229, 0.0
    %v246 = vmax.f32 %v230, 0.0
    %v247 = vsub.f32 0.0, %v215
    %v248 = vsub.f32 0.0, %v216
    %v249 = vsub.f32 0.0, %v217
    %v250 = vsub.f32 0.0, %v218
    %v251 = vsub.f32 0.0, %v219
    %v252 = vsub.f32 0.0, %v220
    %v253 = vsub.f32 0.0, %v221
    %v254 = vsub.f32 0.0, %v222
    %v255 = vsub.f32 0.0, %v223
    %v256 = vsub.f32 0.0, %v224
    %v257 = vsub.f32 0.0, %v225
    %v258 = vsub.f32 0.0, %v226
    %v259 = vsub.f32 0.0, %v227
    %v260 = vsub.f32 0.0, %v228
    %v261 = vsub.f32 0.0, %v229
    %v262 = vsub.f32 0.0, %v230
    %vm263 = vcmp.ne.f32.partialorder %v247, %v247
    %vm264 = vcmp.ne.f32.partialorder %v248, %v248
    %vm265 = vcmp.ne.f32.partialorder %v249, %v249
    %vm266 = vcmp.ne.f32.partialorder %v250, %v250
    %vm267 = vcmp.ne.f32.partialorder %v251, %v251
    %vm268 = vcmp.ne.f32.partialorder %v252, %v252
    %vm269 = vcmp.ne.f32.partialorder %v253, %v253
    %vm270 = vcmp.ne.f32.partialorder %v254, %v254
    %vm271 = vcmp.ne.f32.partialorder %v255, %v255
    %vm272 = vcmp.ne.f32.partialorder %v256, %v256
    %vm273 = vcmp.ne.f32.partialorder %v257, %v257
    %vm274 = vcmp.ne.f32.partialorder %v258, %v258
    %vm275 = vcmp.ne.f32.partialorder %v259, %v259
    %vm276 = vcmp.ne.f32.partialorder %v260, %v260
    %vm277 = vcmp.ne.f32.partialorder %v261, %v261
    %vm278 = vcmp.ne.f32.partialorder %v262, %v262
    %v279 = vadd.f32 %v215, 0.0
    %v280 = vadd.f32 %v216, 0.0
    %v281 = vadd.f32 %v217, 0.0
    %v282 = vadd.f32 %v218, 0.0
    %v283 = vadd.f32 %v219, 0.0
    %v284 = vadd.f32 %v220, 0.0
    %v285 = vadd.f32 %v221, 0.0
    %v286 = vadd.f32 %v222, 0.0
    %v287 = vadd.f32 %v223, 0.0
    %v288 = vadd.f32 %v224, 0.0
    %v289 = vadd.f32 %v225, 0.0
    %v290 = vadd.f32 %v226, 0.0
    %v291 = vadd.f32 %v227, 0.0
    %v292 = vadd.f32 %v228, 0.0
    %v293 = vadd.f32 %v229, 0.0
    %v294 = vadd.f32 %v230, 0.0
    %v295 = vand.u32 2147483647, %v247
    %v296 = vand.u32 2147483647, %v248
    %v297 = vand.u32 2147483647, %v249
    %v298 = vand.u32 2147483647, %v250
    %v299 = vand.u32 2147483647, %v251
    %v300 = vand.u32 2147483647, %v252
    %v301 = vand.u32 2147483647, %v253
    %v302 = vand.u32 2147483647, %v254
    %v303 = vand.u32 2147483647, %v255
    %v304 = vand.u32 2147483647, %v256
    %v305 = vand.u32 2147483647, %v257
    %v306 = vand.u32 2147483647, %v258
    %v307 = vand.u32 2147483647, %v259
    %v308 = vand.u32 2147483647, %v260
    %v309 = vand.u32 2147483647, %v261
    %v310 = vand.u32 2147483647, %v262
    %v311 = vsub.f32 0.0, %v295
    %v312 = vsub.f32 0.0, %v296
    %v313 = vsub.f32 0.0, %v297
    %v314 = vsub.f32 0.0, %v298
    %v315 = vsub.f32 0.0, %v299
    %v316 = vsub.f32 0.0, %v300
    %v317 = vsub.f32 0.0, %v301
    %v318 = vsub.f32 0.0, %v302
    %v319 = vsub.f32 0.0, %v303
    %v320 = vsub.f32 0.0, %v304
    %v321 = vsub.f32 0.0, %v305
    %v322 = vsub.f32 0.0, %v306
    %v323 = vsub.f32 0.0, %v307
    %v324 = vsub.f32 0.0, %v308
    %v325 = vsub.f32 0.0, %v309
    %v326 = vsub.f32 0.0, %v310
    %v327 = vmul.f32 %v311, 1.442695
    %v328 = vpow.pop %v327
    %v329 = vmul.f32 %v312, 1.442695
    %v330 = vpow.pop %v329
    %v331 = vmul.f32 %v313, 1.442695
    %v332 = vpow.pop %v331
    %v333 = vmul.f32 %v314, 1.442695
    %v334 = vpow.pop %v333
    %v335 = vmul.f32 %v315, 1.442695
    %v336 = vpow.pop %v335
    %v337 = vmul.f32 %v316, 1.442695
    %v338 = vpow.pop %v337
    %v339 = vmul.f32 %v317, 1.442695
    %v340 = vpow.pop %v339
    %v341 = vmul.f32 %v318, 1.442695
    %v342 = vpow.pop %v341
    %v343 = vmul.f32 %v319, 1.442695
    %v344 = vpow.pop %v343
    %v345 = vmul.f32 %v320, 1.442695
    %v346 = vpow.pop %v345
    %v347 = vmul.f32 %v321, 1.442695
    %v348 = vpow.pop %v347
    %v349 = vmul.f32 %v322, 1.442695
    %v350 = vpow.pop %v349
    %v351 = vmul.f32 %v323, 1.442695
    %v352 = vpow.pop %v351
    %v353 = vmul.f32 %v324, 1.442695
    %v354 = vpow.pop %v353
    %v355 = vmul.f32 %v325, 1.442695
    %v356 = vpow.pop %v355
    %v357 = vmul.f32 %v326, 1.442695
    %v358 = vpow.pop %v357
    %v359 = vadd.f32 %v328, 1.0
    %v360 = vlog2.pop %v359
    %v361 = vmul.f32 %v360, 0.6931472
    %v362 = vmul.f32 -0.5, %v328
    %v363 = vadd.f32 %v362, 1.0
    %v364 = vmul.f32 %v363, %v328
    %v365 = vand.u32 2147483647, %v328
    %vm366 = vcmp.lt.f32.partialorder %v365, 0.0004427343
    %v367 = vsel %vm366, %v364, %v361
    %v368 = vadd.f32 %v330, 1.0
    %v369 = vlog2.pop %v368
    %v370 = vmul.f32 %v369, 0.6931472
    %v371 = vmul.f32 -0.5, %v330
    %v372 = vadd.f32 %v371, 1.0
    %v373 = vmul.f32 %v372, %v330
    %v374 = vand.u32 2147483647, %v330
    %vm375 = vcmp.lt.f32.partialorder %v374, 0.0004427343
    %v376 = vsel %vm375, %v373, %v370
    %v377 = vadd.f32 %v332, 1.0
    %v378 = vlog2.pop %v377
    %v379 = vmul.f32 %v378, 0.6931472
    %v380 = vmul.f32 -0.5, %v332
    %v381 = vadd.f32 %v380, 1.0
    %v382 = vmul.f32 %v381, %v332
    %v383 = vand.u32 2147483647, %v332
    %vm384 = vcmp.lt.f32.partialorder %v383, 0.0004427343
    %v385 = vsel %vm384, %v382, %v379
    %v386 = vadd.f32 %v334, 1.0
    %v387 = vlog2.pop %v386
    %v388 = vmul.f32 %v387, 0.6931472
    %v389 = vmul.f32 -0.5, %v334
    %v390 = vadd.f32 %v389, 1.0
    %v391 = vmul.f32 %v390, %v334
    %v392 = vand.u32 2147483647, %v334
    %vm393 = vcmp.lt.f32.partialorder %v392, 0.0004427343
    %v394 = vsel %vm393, %v391, %v388
    %v395 = vadd.f32 %v336, 1.0
    %v396 = vlog2.pop %v395
    %v397 = vmul.f32 %v396, 0.6931472
    %v398 = vmul.f32 -0.5, %v336
    %v399 = vadd.f32 %v398, 1.0
    %v400 = vmul.f32 %v399, %v336
    %v401 = vand.u32 2147483647, %v336
    %vm402 = vcmp.lt.f32.partialorder %v401, 0.0004427343
    %v403 = vsel %vm402, %v400, %v397
    %v404 = vadd.f32 %v338, 1.0
    %v405 = vlog2.pop %v404
    %v406 = vmul.f32 %v405, 0.6931472
    %v407 = vmul.f32 -0.5, %v338
    %v408 = vadd.f32 %v407, 1.0
    %v409 = vmul.f32 %v408, %v338
    %v410 = vand.u32 2147483647, %v338
    %vm411 = vcmp.lt.f32.partialorder %v410, 0.0004427343
    %v412 = vsel %vm411, %v409, %v406
    %v413 = vadd.f32 %v340, 1.0
    %v414 = vlog2.pop %v413
    %v415 = vmul.f32 %v414, 0.6931472
    %v416 = vmul.f32 -0.5, %v340
    %v417 = vadd.f32 %v416, 1.0
    %v418 = vmul.f32 %v417, %v340
    %v419 = vand.u32 2147483647, %v340
    %vm420 = vcmp.lt.f32.partialorder %v419, 0.0004427343
    %v421 = vsel %vm420, %v418, %v415
    %v422 = vadd.f32 %v342, 1.0
    %v423 = vlog2.pop %v422
    %v424 = vmul.f32 %v423, 0.6931472
    %v425 = vmul.f32 -0.5, %v342
    %v426 = vadd.f32 %v425, 1.0
    %v427 = vmul.f32 %v426, %v342
    %v428 = vand.u32 2147483647, %v342
    %vm429 = vcmp.lt.f32.partialorder %v428, 0.0004427343
    %v430 = vsel %vm429, %v427, %v424
    %v431 = vadd.f32 %v344, 1.0
    %v432 = vlog2.pop %v431
    %v433 = vmul.f32 %v432, 0.6931472
    %v434 = vmul.f32 -0.5, %v344
    %v435 = vadd.f32 %v434, 1.0
    %v436 = vmul.f32 %v435, %v344
    %v437 = vand.u32 2147483647, %v344
    %vm438 = vcmp.lt.f32.partialorder %v437, 0.0004427343
    %v439 = vsel %vm438, %v436, %v433
    %v440 = vadd.f32 %v346, 1.0
    %v441 = vlog2.pop %v440
    %v442 = vmul.f32 %v441, 0.6931472
    %v443 = vmul.f32 -0.5, %v346
    %v444 = vadd.f32 %v443, 1.0
    %v445 = vmul.f32 %v444, %v346
    %v446 = vand.u32 2147483647, %v346
    %vm447 = vcmp.lt.f32.partialorder %v446, 0.0004427343
    %v448 = vsel %vm447, %v445, %v442
    %v449 = vadd.f32 %v348, 1.0
    %v450 = vlog2.pop %v449
    %v451 = vmul.f32 %v450, 0.6931472
    %v452 = vmul.f32 -0.5, %v348
    %v453 = vadd.f32 %v452, 1.0
    %v454 = vmul.f32 %v453, %v348
    %v455 = vand.u32 2147483647, %v348
    %vm456 = vcmp.lt.f32.partialorder %v455, 0.0004427343
    %v457 = vsel %vm456, %v454, %v451
    %v458 = vadd.f32 %v350, 1.0
    %v459 = vlog2.pop %v458
    %v460 = vmul.f32 %v459, 0.6931472
    %v461 = vmul.f32 -0.5, %v350
    %v462 = vadd.f32 %v461, 1.0
    %v463 = vmul.f32 %v462, %v350
    %v464 = vand.u32 2147483647, %v350
    %vm465 = vcmp.lt.f32.partialorder %v464, 0.0004427343
    %v466 = vsel %vm465, %v463, %v460
    %v467 = vadd.f32 %v352, 1.0
    %v468 = vlog2.pop %v467
    %v469 = vmul.f32 %v468, 0.6931472
    %v470 = vmul.f32 -0.5, %v352
    %v471 = vadd.f32 %v470, 1.0
    %v472 = vmul.f32 %v471, %v352
    %v473 = vand.u32 2147483647, %v352
    %vm474 = vcmp.lt.f32.partialorder %v473, 0.0004427343
    %v475 = vsel %vm474, %v472, %v469
    %v476 = vadd.f32 %v354, 1.0
    %v477 = vlog2.pop %v476
    %v478 = vmul.f32 %v477, 0.6931472
    %v479 = vmul.f32 -0.5, %v354
    %v480 = vadd.f32 %v479, 1.0
    %v481 = vmul.f32 %v480, %v354
    %v482 = vand.u32 2147483647, %v354
    %vm483 = vcmp.lt.f32.partialorder %v482, 0.0004427343
    %v484 = vsel %vm483, %v481, %v478
    %v485 = vadd.f32 %v356, 1.0
    %v486 = vlog2.pop %v485
    %v487 = vmul.f32 %v486, 0.6931472
    %v488 = vmul.f32 -0.5, %v356
    %v489 = vadd.f32 %v488, 1.0
    %v490 = vmul.f32 %v489, %v356
    %v491 = vand.u32 2147483647, %v356
    %vm492 = vcmp.lt.f32.partialorder %v491, 0.0004427343
    %v493 = vsel %vm492, %v490, %v487
    %v494 = vadd.f32 %v358, 1.0
    %v495 = vlog2.pop %v494
    %v496 = vmul.f32 %v495, 0.6931472
    %v497 = vmul.f32 -0.5, %v358
    %v498 = vadd.f32 %v497, 1.0
    %v499 = vmul.f32 %v498, %v358
    %v500 = vand.u32 2147483647, %v358
    %vm501 = vcmp.lt.f32.partialorder %v500, 0.0004427343
    %v502 = vsel %vm501, %v499, %v496
    %v503 = vadd.f32 %v231, %v367
    %v504 = vadd.f32 %v232, %v376
    %v505 = vadd.f32 %v233, %v385
    %v506 = vadd.f32 %v234, %v394
    %v507 = vadd.f32 %v235, %v403
    %v508 = vadd.f32 %v236, %v412
    %v509 = vadd.f32 %v237, %v421
    %v510 = vadd.f32 %v238, %v430
    %v511 = vadd.f32 %v239, %v439
    %v512 = vadd.f32 %v240, %v448
    %v513 = vadd.f32 %v241, %v457
    %v514 = vadd.f32 %v242, %v466
    %v515 = vadd.f32 %v243, %v475
    %v516 = vadd.f32 %v244, %v484
    %v517 = vadd.f32 %v245, %v493
    %v518 = vadd.f32 %v246, %v502
    %v519 = vsel %vm263, %v279, %v503
    %v520 = vsel %vm264, %v280, %v504
    %v521 = vsel %vm265, %v281, %v505
    %v522 = vsel %vm266, %v282, %v506
    %v523 = vsel %vm267, %v283, %v507
    %v524 = vsel %vm268, %v284, %v508
    %v525 = vsel %vm269, %v285, %v509
    %v526 = vsel %vm270, %v286, %v510
    %v527 = vsel %vm271, %v287, %v511
    %v528 = vsel %vm272, %v288, %v512
    %v529 = vsel %vm273, %v289, %v513
    %v530 = vsel %vm274, %v290, %v514
    %v531 = vsel %vm275, %v291, %v515
    %v532 = vsel %vm276, %v292, %v516
    %v533 = vsel %vm277, %v293, %v517
    %v534 = vsel %vm278, %v294, %v518
    %v535 = vld [vmem:[#allocation8] sm:$0xff]
    %v536 = vld [vmem:[#allocation8 + $0x8] sm:$0xff]
    %v537 = vld [vmem:[#allocation8 + $0x10] sm:$0xff]
    %v538 = vld [vmem:[#allocation8 + $0x18] sm:$0xff]
    %v539 = vld [vmem:[#allocation8 + $0x20] sm:$0xff]
    %v540 = vld [vmem:[#allocation8 + $0x28] sm:$0xff]
    %v541 = vld [vmem:[#allocation8 + $0x30] sm:$0xff]
    %v542 = vld [vmem:[#allocation8 + $0x38] sm:$0xff]
    %v543 = vld [vmem:[#allocation8 + $0x40] sm:$0xff]
    %v544 = vld [vmem:[#allocation8 + $0x48] sm:$0xff]
    %v545 = vld [vmem:[#allocation8 + $0x50] sm:$0xff]
    %v546 = vld [vmem:[#allocation8 + $0x58] sm:$0xff]
    %v547 = vld [vmem:[#allocation8 + $0x60] sm:$0xff]
    %v548 = vld [vmem:[#allocation8 + $0x68] sm:$0xff]
    %v549 = vld [vmem:[#allocation8 + $0x70] sm:$0xff]
    %v550 = vld [vmem:[#allocation8 + $0x78] sm:$0xff]
    %v551 = vmul.f32 %v519, %v535
    %v552 = vmul.f32 %v520, %v536
    %v553 = vmul.f32 %v521, %v537
    %v554 = vmul.f32 %v522, %v538
    %v555 = vmul.f32 %v523, %v539
    %v556 = vmul.f32 %v524, %v540
    %v557 = vmul.f32 %v525, %v541
    %v558 = vmul.f32 %v526, %v542
    %v559 = vmul.f32 %v527, %v543
    %v560 = vmul.f32 %v528, %v544
    %v561 = vmul.f32 %v529, %v545
    %v562 = vmul.f32 %v530, %v546
    %v563 = vmul.f32 %v531, %v547
    %v564 = vmul.f32 %v532, %v548
    %v565 = vmul.f32 %v533, %v549
    %v566 = vmul.f32 %v534, %v550
    %v567 = vadd.f32 %v199, %v551
    %v568 = vadd.f32 %v200, %v552
    %v569 = vadd.f32 %v201, %v553
    %v570 = vadd.f32 %v202, %v554
    %v571 = vadd.f32 %v203, %v555
    %v572 = vadd.f32 %v204, %v556
    %v573 = vadd.f32 %v205, %v557
    %v574 = vadd.f32 %v206, %v558
    %v575 = vadd.f32 %v207, %v559
    %v576 = vadd.f32 %v208, %v560
    %v577 = vadd.f32 %v209, %v561
    %v578 = vadd.f32 %v210, %v562
    %v579 = vadd.f32 %v211, %v563
    %v580 = vadd.f32 %v212, %v564
    %v581 = vadd.f32 %v213, %v565
    %v582 = vadd.f32 %v214, %v566
    %v583 = vld [vmem:[%s4] sm:$0x1]
    %v584 = vld [vmem:[%s5] sm:$0x1]
    %v585 = vmax.f32 %v584, 0.0
    %v586 = vsub.f32 0.0, %v584
    %vm587 = vcmp.ne.f32.partialorder %v586, %v586
    %v588 = vadd.f32 %v584, 0.0
    %v589 = vand.u32 2147483647, %v586
    %v590 = vsub.f32 0.0, %v589
    %v591 = vmul.f32 %v590, 1.442695
    %v592 = vpow.pop %v591
    %v593 = vadd.f32 %v592, 1.0
    %v594 = vlog2.pop %v593
    %v595 = vmul.f32 %v594, 0.6931472
    %v596 = vmul.f32 -0.5, %v592
    %v597 = vadd.f32 %v596, 1.0
    %v598 = vmul.f32 %v597, %v592
    %v599 = vand.u32 2147483647, %v592
    %vm600 = vcmp.lt.f32.partialorder %v599, 0.0004427343
    %v601 = vsel %vm600, %v598, %v595
    %v602 = vadd.f32 %v585, %v601
    %v603 = vsel %vm587, %v588, %v602
    %v604 = vld [vmem:[%s6] sm:$0x1]
    %v605 = vmul.f32 %v603, %v604
    %v606 = vadd.f32 %v583, %v605
    %v607 = vpack.c.bf16 %v198, %v198
    %v608 = vpack.c.bf16 %v568, %v567
    %v609 = vpack.c.bf16 %v570, %v569
    %v610 = vpack.c.bf16 %v572, %v571
    %v611 = vpack.c.bf16 %v574, %v573
    %v612 = vpack.c.bf16 %v576, %v575
    %v613 = vpack.c.bf16 %v578, %v577
    %v614 = vpack.c.bf16 %v580, %v579
    %v615 = vpack.c.bf16 %v582, %v581
    %v617 = vlaneseq
    %v618 = vshrl.u32 %v617, 7
    %v619 = vsub.s32 0, %v618
    %v620 = vrot.slane %v606, %v619
    %622 = vmatprep.subr.bf16.mxu0 0
    %623 = vmatpush1.bf16.msra.mxu0 %v608
    %624 = vmatprep.subr.bf16.mxu0 0
    %625 = vmatpush1.bf16.msra.mxu0 %v609
    %626 = vmatprep.subr.bf16.mxu0 0
    %627 = vmatpush1.bf16.msra.mxu0 %v610
    %628 = vmatprep.subr.bf16.mxu0 0
    %629 = vmatpush1.bf16.msra.mxu0 %v611
    %630 = vmatprep.subr.bf16.mxu0 0
    %631 = vmatpush1.bf16.msra.mxu0 %v612
    %632 = vmatprep.subr.bf16.mxu0 0
    %633 = vmatpush1.bf16.msra.mxu0 %v613
    %634 = vmatprep.subr.bf16.mxu0 0
    %635 = vmatpush1.bf16.msra.mxu0 %v614
    %636 = vmatprep.subr.bf16.mxu0 0
    %637 = vmatpush1.bf16.msra.mxu0 %v615
    %638 = vmatprep.subr.bf16.mxu0 0
    %639 = vmatpush1.bf16.msra.mxu0 0
    %640 = vmatprep.subr.bf16.mxu0 0
    %641 = vmatpush1.bf16.msra.mxu0 0
    %642 = vmatprep.subr.bf16.mxu0 0
    %643 = vmatpush1.bf16.msra.mxu0 0
    %644 = vmatprep.subr.bf16.mxu0 0
    %645 = vmatpush1.bf16.msra.mxu0 0
    %646 = vmatprep.subr.bf16.mxu0 0
    %647 = vmatpush1.bf16.msra.mxu0 0
    %648 = vmatprep.subr.bf16.mxu0 0
    %649 = vmatpush1.bf16.msra.mxu0 0
    %650 = vmatprep.subr.bf16.mxu0 0
    %651 = vmatpush1.bf16.msra.mxu0 0
    %652 = vmatprep.subr.bf16.mxu0 0
    %653 = vmatpush1.bf16.msra.mxu0 0
    %654 = vmatprep.mubr.bf16.mxu0 0
    %655 = vmatmul.mubr.bf16.gmra.mrb[0].mxu0 %v607
    %v656 = vpop.f32.mrb[0].mxu0
    %v657 = vadd.f32 %v620, %v656
    %v658 = vpop.f32.mrb[0].mxu0
    %v659 = vpop.f32.mrb[0].mxu0
    %v660 = vpop.f32.mrb[0].mxu0
    %661 = vdwg.mxu0
    %v662 = vtanh.pop %v657
    %v663 = vld [vmem:[#allocation10] sm:$0xff]
    %v664 = vld [vmem:[#allocation10 + $0x8] sm:$0xff]
    %v665 = vld [vmem:[#allocation10 + $0x10] sm:$0xff]
    %v666 = vld [vmem:[#allocation10 + $0x18] sm:$0xff]
    %v667 = vld [vmem:[#allocation10 + $0x20] sm:$0xff]
    %v668 = vld [vmem:[#allocation10 + $0x28] sm:$0xff]
    %v669 = vld [vmem:[#allocation10 + $0x30] sm:$0xff]
    %v670 = vld [vmem:[#allocation10 + $0x38] sm:$0xff]
    %v671 = vld [vmem:[#allocation10 + $0x40] sm:$0xff]
    %v672 = vld [vmem:[#allocation10 + $0x48] sm:$0xff]
    %v673 = vld [vmem:[#allocation10 + $0x50] sm:$0xff]
    %v674 = vld [vmem:[#allocation10 + $0x58] sm:$0xff]
    %v675 = vld [vmem:[#allocation10 + $0x60] sm:$0xff]
    %v676 = vld [vmem:[#allocation10 + $0x68] sm:$0xff]
    %v677 = vld [vmem:[#allocation10 + $0x70] sm:$0xff]
    %v678 = vld [vmem:[#allocation10 + $0x78] sm:$0xff]
    %v679 = vld [vmem:[#allocation11] sm:$0xff]
    %v680 = vld [vmem:[#allocation11 + $0x8] sm:$0xff]
    %v681 = vld [vmem:[#allocation11 + $0x10] sm:$0xff]
    %v682 = vld [vmem:[#allocation11 + $0x18] sm:$0xff]
    %v683 = vld [vmem:[#allocation11 + $0x20] sm:$0xff]
    %v684 = vld [vmem:[#allocation11 + $0x28] sm:$0xff]
    %v685 = vld [vmem:[#allocation11 + $0x30] sm:$0xff]
    %v686 = vld [vmem:[#allocation11 + $0x38] sm:$0xff]
    %v687 = vld [vmem:[#allocation11 + $0x40] sm:$0xff]
    %v688 = vld [vmem:[#allocation11 + $0x48] sm:$0xff]
    %v689 = vld [vmem:[#allocation11 + $0x50] sm:$0xff]
    %v690 = vld [vmem:[#allocation11 + $0x58] sm:$0xff]
    %v691 = vld [vmem:[#allocation11 + $0x60] sm:$0xff]
    %v692 = vld [vmem:[#allocation11 + $0x68] sm:$0xff]
    %v693 = vld [vmem:[#allocation11 + $0x70] sm:$0xff]
    %v694 = vld [vmem:[#allocation11 + $0x78] sm:$0xff]
    %v695 = vmax.f32 %v679, 0.0
    %v696 = vmax.f32 %v680, 0.0
    %v697 = vmax.f32 %v681, 0.0
    %v698 = vmax.f32 %v682, 0.0
    %v699 = vmax.f32 %v683, 0.0
    %v700 = vmax.f32 %v684, 0.0
    %v701 = vmax.f32 %v685, 0.0
    %v702 = vmax.f32 %v686, 0.0
    %v703 = vmax.f32 %v687, 0.0
    %v704 = vmax.f32 %v688, 0.0
    %v705 = vmax.f32 %v689, 0.0
    %v706 = vmax.f32 %v690, 0.0
    %v707 = vmax.f32 %v691, 0.0
    %v708 = vmax.f32 %v692, 0.0
    %v709 = vmax.f32 %v693, 0.0
    %v710 = vmax.f32 %v694, 0.0
    %v711 = vsub.f32 0.0, %v679
    %v712 = vsub.f32 0.0, %v680
    %v713 = vsub.f32 0.0, %v681
    %v714 = vsub.f32 0.0, %v682
    %v715 = vsub.f32 0.0, %v683
    %v716 = vsub.f32 0.0, %v684
    %v717 = vsub.f32 0.0, %v685
    %v718 = vsub.f32 0.0, %v686
    %v719 = vsub.f32 0.0, %v687
    %v720 = vsub.f32 0.0, %v688
    %v721 = vsub.f32 0.0, %v689
    %v722 = vsub.f32 0.0, %v690
    %v723 = vsub.f32 0.0, %v691
    %v724 = vsub.f32 0.0, %v692
    %v725 = vsub.f32 0.0, %v693
    %v726 = vsub.f32 0.0, %v694
    %vm727 = vcmp.ne.f32.partialorder %v711, %v711
    %vm728 = vcmp.ne.f32.partialorder %v712, %v712
    %vm729 = vcmp.ne.f32.partialorder %v713, %v713
    %vm730 = vcmp.ne.f32.partialorder %v714, %v714
    %vm731 = vcmp.ne.f32.partialorder %v715, %v715
    %vm732 = vcmp.ne.f32.partialorder %v716, %v716
    %vm733 = vcmp.ne.f32.partialorder %v717, %v717
    %vm734 = vcmp.ne.f32.partialorder %v718, %v718
    %vm735 = vcmp.ne.f32.partialorder %v719, %v719
    %vm736 = vcmp.ne.f32.partialorder %v720, %v720
    %vm737 = vcmp.ne.f32.partialorder %v721, %v721
    %vm738 = vcmp.ne.f32.partialorder %v722, %v722
    %vm739 = vcmp.ne.f32.partialorder %v723, %v723
    %vm740 = vcmp.ne.f32.partialorder %v724, %v724
    %vm741 = vcmp.ne.f32.partialorder %v725, %v725
    %vm742 = vcmp.ne.f32.partialorder %v726, %v726
    %v743 = vadd.f32 %v679, 0.0
    %v744 = vadd.f32 %v680, 0.0
    %v745 = vadd.f32 %v681, 0.0
    %v746 = vadd.f32 %v682, 0.0
    %v747 = vadd.f32 %v683, 0.0
    %v748 = vadd.f32 %v684, 0.0
    %v749 = vadd.f32 %v685, 0.0
    %v750 = vadd.f32 %v686, 0.0
    %v751 = vadd.f32 %v687, 0.0
    %v752 = vadd.f32 %v688, 0.0
    %v753 = vadd.f32 %v689, 0.0
    %v754 = vadd.f32 %v690, 0.0
    %v755 = vadd.f32 %v691, 0.0
    %v756 = vadd.f32 %v692, 0.0
    %v757 = vadd.f32 %v693, 0.0
    %v758 = vadd.f32 %v694, 0.0
    %v759 = vand.u32 2147483647, %v711
    %v760 = vand.u32 2147483647, %v712
    %v761 = vand.u32 2147483647, %v713
    %v762 = vand.u32 2147483647, %v714
    %v763 = vand.u32 2147483647, %v715
    %v764 = vand.u32 2147483647, %v716
    %v765 = vand.u32 2147483647, %v717
    %v766 = vand.u32 2147483647, %v718
    %v767 = vand.u32 2147483647, %v719
    %v768 = vand.u32 2147483647, %v720
    %v769 = vand.u32 2147483647, %v721
    %v770 = vand.u32 2147483647, %v722
    %v771 = vand.u32 2147483647, %v723
    %v772 = vand.u32 2147483647, %v724
    %v773 = vand.u32 2147483647, %v725
    %v774 = vand.u32 2147483647, %v726
    %v775 = vsub.f32 0.0, %v759
    %v776 = vsub.f32 0.0, %v760
    %v777 = vsub.f32 0.0, %v761
    %v778 = vsub.f32 0.0, %v762
    %v779 = vsub.f32 0.0, %v763
    %v780 = vsub.f32 0.0, %v764
    %v781 = vsub.f32 0.0, %v765
    %v782 = vsub.f32 0.0, %v766
    %v783 = vsub.f32 0.0, %v767
    %v784 = vsub.f32 0.0, %v768
    %v785 = vsub.f32 0.0, %v769
    %v786 = vsub.f32 0.0, %v770
    %v787 = vsub.f32 0.0, %v771
    %v788 = vsub.f32 0.0, %v772
    %v789 = vsub.f32 0.0, %v773
    %v790 = vsub.f32 0.0, %v774
    %v791 = vmul.f32 %v775, 1.442695
    %v792 = vpow.pop %v791
    %v793 = vmul.f32 %v776, 1.442695
    %v794 = vpow.pop %v793
    %v795 = vmul.f32 %v777, 1.442695
    %v796 = vpow.pop %v795
    %v797 = vmul.f32 %v778, 1.442695
    %v798 = vpow.pop %v797
    %v799 = vmul.f32 %v779, 1.442695
    %v800 = vpow.pop %v799
    %v801 = vmul.f32 %v780, 1.442695
    %v802 = vpow.pop %v801
    %v803 = vmul.f32 %v781, 1.442695
    %v804 = vpow.pop %v803
    %v805 = vmul.f32 %v782, 1.442695
    %v806 = vpow.pop %v805
    %v807 = vmul.f32 %v783, 1.442695
    %v808 = vpow.pop %v807
    %v809 = vmul.f32 %v784, 1.442695
    %v810 = vpow.pop %v809
    %v811 = vmul.f32 %v785, 1.442695
    %v812 = vpow.pop %v811
    %v813 = vmul.f32 %v786, 1.442695
    %v814 = vpow.pop %v813
    %v815 = vmul.f32 %v787, 1.442695
    %v816 = vpow.pop %v815
    %v817 = vmul.f32 %v788, 1.442695
    %v818 = vpow.pop %v817
    %v819 = vmul.f32 %v789, 1.442695
    %v820 = vpow.pop %v819
    %v821 = vmul.f32 %v790, 1.442695
    %v822 = vpow.pop %v821
    %v823 = vadd.f32 %v792, 1.0
    %v824 = vlog2.pop %v823
    %v825 = vmul.f32 %v824, 0.6931472
    %v826 = vmul.f32 -0.5, %v792
    %v827 = vadd.f32 %v826, 1.0
    %v828 = vmul.f32 %v827, %v792
    %v829 = vand.u32 2147483647, %v792
    %vm830 = vcmp.lt.f32.partialorder %v829, 0.0004427343
    %v831 = vsel %vm830, %v828, %v825
    %v832 = vadd.f32 %v794, 1.0
    %v833 = vlog2.pop %v832
    %v834 = vmul.f32 %v833, 0.6931472
    %v835 = vmul.f32 -0.5, %v794
    %v836 = vadd.f32 %v835, 1.0
    %v837 = vmul.f32 %v836, %v794
    %v838 = vand.u32 2147483647, %v794
    %vm839 = vcmp.lt.f32.partialorder %v838, 0.0004427343
    %v840 = vsel %vm839, %v837, %v834
    %v841 = vadd.f32 %v796, 1.0
    %v842 = vlog2.pop %v841
    %v843 = vmul.f32 %v842, 0.6931472
    %v844 = vmul.f32 -0.5, %v796
    %v845 = vadd.f32 %v844, 1.0
    %v846 = vmul.f32 %v845, %v796
    %v847 = vand.u32 2147483647, %v796
    %vm848 = vcmp.lt.f32.partialorder %v847, 0.0004427343
    %v849 = vsel %vm848, %v846, %v843
    %v850 = vadd.f32 %v798, 1.0
    %v851 = vlog2.pop %v850
    %v852 = vmul.f32 %v851, 0.6931472
    %v853 = vmul.f32 -0.5, %v798
    %v854 = vadd.f32 %v853, 1.0
    %v855 = vmul.f32 %v854, %v798
    %v856 = vand.u32 2147483647, %v798
    %vm857 = vcmp.lt.f32.partialorder %v856, 0.0004427343
    %v858 = vsel %vm857, %v855, %v852
    %v859 = vadd.f32 %v800, 1.0
    %v860 = vlog2.pop %v859
    %v861 = vmul.f32 %v860, 0.6931472
    %v862 = vmul.f32 -0.5, %v800
    %v863 = vadd.f32 %v862, 1.0
    %v864 = vmul.f32 %v863, %v800
    %v865 = vand.u32 2147483647, %v800
    %vm866 = vcmp.lt.f32.partialorder %v865, 0.0004427343
    %v867 = vsel %vm866, %v864, %v861
    %v868 = vadd.f32 %v802, 1.0
    %v869 = vlog2.pop %v868
    %v870 = vmul.f32 %v869, 0.6931472
    %v871 = vmul.f32 -0.5, %v802
    %v872 = vadd.f32 %v871, 1.0
    %v873 = vmul.f32 %v872, %v802
    %v874 = vand.u32 2147483647, %v802
    %vm875 = vcmp.lt.f32.partialorder %v874, 0.0004427343
    %v876 = vsel %vm875, %v873, %v870
    %v877 = vadd.f32 %v804, 1.0
    %v878 = vlog2.pop %v877
    %v879 = vmul.f32 %v878, 0.6931472
    %v880 = vmul.f32 -0.5, %v804
    %v881 = vadd.f32 %v880, 1.0
    %v882 = vmul.f32 %v881, %v804
    %v883 = vand.u32 2147483647, %v804
    %vm884 = vcmp.lt.f32.partialorder %v883, 0.0004427343
    %v885 = vsel %vm884, %v882, %v879
    %v886 = vadd.f32 %v806, 1.0
    %v887 = vlog2.pop %v886
    %v888 = vmul.f32 %v887, 0.6931472
    %v889 = vmul.f32 -0.5, %v806
    %v890 = vadd.f32 %v889, 1.0
    %v891 = vmul.f32 %v890, %v806
    %v892 = vand.u32 2147483647, %v806
    %vm893 = vcmp.lt.f32.partialorder %v892, 0.0004427343
    %v894 = vsel %vm893, %v891, %v888
    %v895 = vadd.f32 %v808, 1.0
    %v896 = vlog2.pop %v895
    %v897 = vmul.f32 %v896, 0.6931472
    %v898 = vmul.f32 -0.5, %v808
    %v899 = vadd.f32 %v898, 1.0
    %v900 = vmul.f32 %v899, %v808
    %v901 = vand.u32 2147483647, %v808
    %vm902 = vcmp.lt.f32.partialorder %v901, 0.0004427343
    %v903 = vsel %vm902, %v900, %v897
    %v904 = vadd.f32 %v810, 1.0
    %v905 = vlog2.pop %v904
    %v906 = vmul.f32 %v905, 0.6931472
    %v907 = vmul.f32 -0.5, %v810
    %v908 = vadd.f32 %v907, 1.0
    %v909 = vmul.f32 %v908, %v810
    %v910 = vand.u32 2147483647, %v810
    %vm911 = vcmp.lt.f32.partialorder %v910, 0.0004427343
    %v912 = vsel %vm911, %v909, %v906
    %v913 = vadd.f32 %v812, 1.0
    %v914 = vlog2.pop %v913
    %v915 = vmul.f32 %v914, 0.6931472
    %v916 = vmul.f32 -0.5, %v812
    %v917 = vadd.f32 %v916, 1.0
    %v918 = vmul.f32 %v917, %v812
    %v919 = vand.u32 2147483647, %v812
    %vm920 = vcmp.lt.f32.partialorder %v919, 0.0004427343
    %v921 = vsel %vm920, %v918, %v915
    %v922 = vadd.f32 %v814, 1.0
    %v923 = vlog2.pop %v922
    %v924 = vmul.f32 %v923, 0.6931472
    %v925 = vmul.f32 -0.5, %v814
    %v926 = vadd.f32 %v925, 1.0
    %v927 = vmul.f32 %v926, %v814
    %v928 = vand.u32 2147483647, %v814
    %vm929 = vcmp.lt.f32.partialorder %v928, 0.0004427343
    %v930 = vsel %vm929, %v927, %v924
    %v931 = vadd.f32 %v816, 1.0
    %v932 = vlog2.pop %v931
    %v933 = vmul.f32 %v932, 0.6931472
    %v934 = vmul.f32 -0.5, %v816
    %v935 = vadd.f32 %v934, 1.0
    %v936 = vmul.f32 %v935, %v816
    %v937 = vand.u32 2147483647, %v816
    %vm938 = vcmp.lt.f32.partialorder %v937, 0.0004427343
    %v939 = vsel %vm938, %v936, %v933
    %v940 = vadd.f32 %v818, 1.0
    %v941 = vlog2.pop %v940
    %v942 = vmul.f32 %v941, 0.6931472
    %v943 = vmul.f32 -0.5, %v818
    %v944 = vadd.f32 %v943, 1.0
    %v945 = vmul.f32 %v944, %v818
    %v946 = vand.u32 2147483647, %v818
    %vm947 = vcmp.lt.f32.partialorder %v946, 0.0004427343
    %v948 = vsel %vm947, %v945, %v942
    %v949 = vadd.f32 %v820, 1.0
    %v950 = vlog2.pop %v949
    %v951 = vmul.f32 %v950, 0.6931472
    %v952 = vmul.f32 -0.5, %v820
    %v953 = vadd.f32 %v952, 1.0
    %v954 = vmul.f32 %v953, %v820
    %v955 = vand.u32 2147483647, %v820
    %vm956 = vcmp.lt.f32.partialorder %v955, 0.0004427343
    %v957 = vsel %vm956, %v954, %v951
    %v958 = vadd.f32 %v822, 1.0
    %v959 = vlog2.pop %v958
    %v960 = vmul.f32 %v959, 0.6931472
    %v961 = vmul.f32 -0.5, %v822
    %v962 = vadd.f32 %v961, 1.0
    %v963 = vmul.f32 %v962, %v822
    %v964 = vand.u32 2147483647, %v822
    %vm965 = vcmp.lt.f32.partialorder %v964, 0.0004427343
    %v966 = vsel %vm965, %v963, %v960
    %v967 = vadd.f32 %v695, %v831
    %v968 = vadd.f32 %v696, %v840
    %v969 = vadd.f32 %v697, %v849
    %v970 = vadd.f32 %v698, %v858
    %v971 = vadd.f32 %v699, %v867
    %v972 = vadd.f32 %v700, %v876
    %v973 = vadd.f32 %v701, %v885
    %v974 = vadd.f32 %v702, %v894
    %v975 = vadd.f32 %v703, %v903
    %v976 = vadd.f32 %v704, %v912
    %v977 = vadd.f32 %v705, %v921
    %v978 = vadd.f32 %v706, %v930
    %v979 = vadd.f32 %v707, %v939
    %v980 = vadd.f32 %v708, %v948
    %v981 = vadd.f32 %v709, %v957
    %v982 = vadd.f32 %v710, %v966
    %v983 = vsel %vm727, %v743, %v967
    %v984 = vsel %vm728, %v744, %v968
    %v985 = vsel %vm729, %v745, %v969
    %v986 = vsel %vm730, %v746, %v970
    %v987 = vsel %vm731, %v747, %v971
    %v988 = vsel %vm732, %v748, %v972
    %v989 = vsel %vm733, %v749, %v973
    %v990 = vsel %vm734, %v750, %v974
    %v991 = vsel %vm735, %v751, %v975
    %v992 = vsel %vm736, %v752, %v976
    %v993 = vsel %vm737, %v753, %v977
    %v994 = vsel %vm738, %v754, %v978
    %v995 = vsel %vm739, %v755, %v979
    %v996 = vsel %vm740, %v756, %v980
    %v997 = vsel %vm741, %v757, %v981
    %v998 = vsel %vm742, %v758, %v982
    %v999 = vld [vmem:[#allocation13] sm:$0xff]
    %v1000 = vld [vmem:[#allocation13 + $0x8] sm:$0xff]
    %v1001 = vld [vmem:[#allocation13 + $0x10] sm:$0xff]
    %v1002 = vld [vmem:[#allocation13 + $0x18] sm:$0xff]
    %v1003 = vld [vmem:[#allocation13 + $0x20] sm:$0xff]
    %v1004 = vld [vmem:[#allocation13 + $0x28] sm:$0xff]
    %v1005 = vld [vmem:[#allocation13 + $0x30] sm:$0xff]
    %v1006 = vld [vmem:[#allocation13 + $0x38] sm:$0xff]
    %v1007 = vld [vmem:[#allocation13 + $0x40] sm:$0xff]
    %v1008 = vld [vmem:[#allocation13 + $0x48] sm:$0xff]
    %v1009 = vld [vmem:[#allocation13 + $0x50] sm:$0xff]
    %v1010 = vld [vmem:[#allocation13 + $0x58] sm:$0xff]
    %v1011 = vld [vmem:[#allocation13 + $0x60] sm:$0xff]
    %v1012 = vld [vmem:[#allocation13 + $0x68] sm:$0xff]
    %v1013 = vld [vmem:[#allocation13 + $0x70] sm:$0xff]
    %v1014 = vld [vmem:[#allocation13 + $0x78] sm:$0xff]
    %v1015 = vmul.f32 %v983, %v999
    %v1016 = vmul.f32 %v984, %v1000
    %v1017 = vmul.f32 %v985, %v1001
    %v1018 = vmul.f32 %v986, %v1002
    %v1019 = vmul.f32 %v987, %v1003
    %v1020 = vmul.f32 %v988, %v1004
    %v1021 = vmul.f32 %v989, %v1005
    %v1022 = vmul.f32 %v990, %v1006
    %v1023 = vmul.f32 %v991, %v1007
    %v1024 = vmul.f32 %v992, %v1008
    %v1025 = vmul.f32 %v993, %v1009
    %v1026 = vmul.f32 %v994, %v1010
    %v1027 = vmul.f32 %v995, %v1011
    %v1028 = vmul.f32 %v996, %v1012
    %v1029 = vmul.f32 %v997, %v1013
    %v1030 = vmul.f32 %v998, %v1014
    %v1031 = vadd.f32 %v663, %v1015
    %v1032 = vadd.f32 %v664, %v1016
    %v1033 = vadd.f32 %v665, %v1017
    %v1034 = vadd.f32 %v666, %v1018
    %v1035 = vadd.f32 %v667, %v1019
    %v1036 = vadd.f32 %v668, %v1020
    %v1037 = vadd.f32 %v669, %v1021
    %v1038 = vadd.f32 %v670, %v1022
    %v1039 = vadd.f32 %v671, %v1023
    %v1040 = vadd.f32 %v672, %v1024
    %v1041 = vadd.f32 %v673, %v1025
    %v1042 = vadd.f32 %v674, %v1026
    %v1043 = vadd.f32 %v675, %v1027
    %v1044 = vadd.f32 %v676, %v1028
    %v1045 = vadd.f32 %v677, %v1029
    %v1046 = vadd.f32 %v678, %v1030
    %v1047 = vld [vmem:[%s10] sm:$0x1]
    %v1048 = vld [vmem:[%s11] sm:$0x1]
    %v1049 = vmax.f32 %v1048, 0.0
    %v1050 = vsub.f32 0.0, %v1048
    %vm1051 = vcmp.ne.f32.partialorder %v1050, %v1050
    %v1052 = vadd.f32 %v1048, 0.0
    %v1053 = vand.u32 2147483647, %v1050
    %v1054 = vsub.f32 0.0, %v1053
    %v1055 = vmul.f32 %v1054, 1.442695
    %v1056 = vpow.pop %v1055
    %v1057 = vadd.f32 %v1056, 1.0
    %v1058 = vlog2.pop %v1057
    %v1059 = vmul.f32 %v1058, 0.6931472
    %v1060 = vmul.f32 -0.5, %v1056
    %v1061 = vadd.f32 %v1060, 1.0
    %v1062 = vmul.f32 %v1061, %v1056
    %v1063 = vand.u32 2147483647, %v1056
    %vm1064 = vcmp.lt.f32.partialorder %v1063, 0.0004427343
    %v1065 = vsel %vm1064, %v1062, %v1059
    %v1066 = vadd.f32 %v1049, %v1065
    %v1067 = vsel %vm1051, %v1052, %v1066
    %v1068 = vld [vmem:[%s12] sm:$0x1]
    %v1069 = vmul.f32 %v1067, %v1068
    %v1070 = vadd.f32 %v1047, %v1069
    %v1071 = vpack.c.bf16 %v662, %v662
    %v1072 = vpack.c.bf16 %v1032, %v1031
    %v1073 = vpack.c.bf16 %v1034, %v1033
    %v1074 = vpack.c.bf16 %v1036, %v1035
    %v1075 = vpack.c.bf16 %v1038, %v1037
    %v1076 = vpack.c.bf16 %v1040, %v1039
    %v1077 = vpack.c.bf16 %v1042, %v1041
    %v1078 = vpack.c.bf16 %v1044, %v1043
    %v1079 = vpack.c.bf16 %v1046, %v1045
    %v1081 = vlaneseq
    %v1082 = vshrl.u32 %v1081, 7
    %v1083 = vsub.s32 0, %v1082
    %v1084 = vrot.slane %v1070, %v1083
    %1086 = vmatprep.subr.bf16.mxu0 0
    %1087 = vmatpush1.bf16.msra.mxu0 %v1072
    %1088 = vmatprep.subr.bf16.mxu0 0
    %1089 = vmatpush1.bf16.msra.mxu0 %v1073
    %1090 = vmatprep.subr.bf16.mxu0 0
    %1091 = vmatpush1.bf16.msra.mxu0 %v1074
    %1092 = vmatprep.subr.bf16.mxu0 0
    %1093 = vmatpush1.bf16.msra.mxu0 %v1075
    %1094 = vmatprep.subr.bf16.mxu0 0
    %1095 = vmatpush1.bf16.msra.mxu0 %v1076
    %1096 = vmatprep.subr.bf16.mxu0 0
    %1097 = vmatpush1.bf16.msra.mxu0 %v1077
    %1098 = vmatprep.subr.bf16.mxu0 0
    %1099 = vmatpush1.bf16.msra.mxu0 %v1078
    %1100 = vmatprep.subr.bf16.mxu0 0
    %1101 = vmatpush1.bf16.msra.mxu0 %v1079
    %1102 = vmatprep.subr.bf16.mxu0 0
    %1103 = vmatpush1.bf16.msra.mxu0 0
    %1104 = vmatprep.subr.bf16.mxu0 0
    %1105 = vmatpush1.bf16.msra.mxu0 0
    %1106 = vmatprep.subr.bf16.mxu0 0
    %1107 = vmatpush1.bf16.msra.mxu0 0
    %1108 = vmatprep.subr.bf16.mxu0 0
    %1109 = vmatpush1.bf16.msra.mxu0 0
    %1110 = vmatprep.subr.bf16.mxu0 0
    %1111 = vmatpush1.bf16.msra.mxu0 0
    %1112 = vmatprep.subr.bf16.mxu0 0
    %1113 = vmatpush1.bf16.msra.mxu0 0
    %1114 = vmatprep.subr.bf16.mxu0 0
    %1115 = vmatpush1.bf16.msra.mxu0 0
    %1116 = vmatprep.subr.bf16.mxu0 0
    %1117 = vmatpush1.bf16.msra.mxu0 0
    %1118 = vmatprep.mubr.bf16.mxu0 0
    %1119 = vmatmul.mubr.bf16.gmra.mrb[0].mxu0 %v1071
    %v1120 = vpop.f32.mrb[0].mxu0
    %v1121 = vadd.f32 %v1084, %v1120
    %v1122 = vpop.f32.mrb[0].mxu0
    %v1123 = vpop.f32.mrb[0].mxu0
    %v1124 = vpop.f32.mrb[0].mxu0
    %1125 = vdwg.mxu0
    %v1126 = vtanh.pop %v1121
    %v1127 = vld [vmem:[#allocation14] sm:$0xff]
    %v1128 = vld [vmem:[#allocation14 + $0x8] sm:$0xff]
    %v1129 = vld [vmem:[#allocation14 + $0x10] sm:$0xff]
    %v1130 = vld [vmem:[#allocation14 + $0x18] sm:$0xff]
    %v1131 = vld [vmem:[#allocation14 + $0x20] sm:$0xff]
    %v1132 = vld [vmem:[#allocation14 + $0x28] sm:$0xff]
    %v1133 = vld [vmem:[#allocation14 + $0x30] sm:$0xff]
    %v1134 = vld [vmem:[#allocation14 + $0x38] sm:$0xff]
    %v1135 = vld [vmem:[#allocation14 + $0x40] sm:$0xff]
    %v1136 = vld [vmem:[#allocation14 + $0x48] sm:$0xff]
    %v1137 = vld [vmem:[#allocation14 + $0x50] sm:$0xff]
    %v1138 = vld [vmem:[#allocation14 + $0x58] sm:$0xff]
    %v1139 = vld [vmem:[#allocation14 + $0x60] sm:$0xff]
    %v1140 = vld [vmem:[#allocation14 + $0x68] sm:$0xff]
    %v1141 = vld [vmem:[#allocation14 + $0x70] sm:$0xff]
    %v1142 = vld [vmem:[#allocation14 + $0x78] sm:$0xff]
    %v1143 = vld [vmem:[#allocation16] sm:$0xff]
    %v1144 = vld [vmem:[#allocation16 + $0x8] sm:$0xff]
    %v1145 = vld [vmem:[#allocation16 + $0x10] sm:$0xff]
    %v1146 = vld [vmem:[#allocation16 + $0x18] sm:$0xff]
    %v1147 = vld [vmem:[#allocation16 + $0x20] sm:$0xff]
    %v1148 = vld [vmem:[#allocation16 + $0x28] sm:$0xff]
    %v1149 = vld [vmem:[#allocation16 + $0x30] sm:$0xff]
    %v1150 = vld [vmem:[#allocation16 + $0x38] sm:$0xff]
    %v1151 = vld [vmem:[#allocation16 + $0x40] sm:$0xff]
    %v1152 = vld [vmem:[#allocation16 + $0x48] sm:$0xff]
    %v1153 = vld [vmem:[#allocation16 + $0x50] sm:$0xff]
    %v1154 = vld [vmem:[#allocation16 + $0x58] sm:$0xff]
    %v1155 = vld [vmem:[#allocation16 + $0x60] sm:$0xff]
    %v1156 = vld [vmem:[#allocation16 + $0x68] sm:$0xff]
    %v1157 = vld [vmem:[#allocation16 + $0x70] sm:$0xff]
    %v1158 = vld [vmem:[#allocation16 + $0x78] sm:$0xff]
    %v1159 = vmax.f32 %v1143, 0.0
    %v1160 = vmax.f32 %v1144, 0.0
    %v1161 = vmax.f32 %v1145, 0.0
    %v1162 = vmax.f32 %v1146, 0.0
    %v1163 = vmax.f32 %v1147, 0.0
    %v1164 = vmax.f32 %v1148, 0.0
    %v1165 = vmax.f32 %v1149, 0.0
    %v1166 = vmax.f32 %v1150, 0.0
    %v1167 = vmax.f32 %v1151, 0.0
    %v1168 = vmax.f32 %v1152, 0.0
    %v1169 = vmax.f32 %v1153, 0.0
    %v1170 = vmax.f32 %v1154, 0.0
    %v1171 = vmax.f32 %v1155, 0.0
    %v1172 = vmax.f32 %v1156, 0.0
    %v1173 = vmax.f32 %v1157, 0.0
    %v1174 = vmax.f32 %v1158, 0.0
    %v1175 = vsub.f32 0.0, %v1143
    %v1176 = vsub.f32 0.0, %v1144
    %v1177 = vsub.f32 0.0, %v1145
    %v1178 = vsub.f32 0.0, %v1146
    %v1179 = vsub.f32 0.0, %v1147
    %v1180 = vsub.f32 0.0, %v1148
    %v1181 = vsub.f32 0.0, %v1149
    %v1182 = vsub.f32 0.0, %v1150
    %v1183 = vsub.f32 0.0, %v1151
    %v1184 = vsub.f32 0.0, %v1152
    %v1185 = vsub.f32 0.0, %v1153
    %v1186 = vsub.f32 0.0, %v1154
    %v1187 = vsub.f32 0.0, %v1155
    %v1188 = vsub.f32 0.0, %v1156
    %v1189 = vsub.f32 0.0, %v1157
    %v1190 = vsub.f32 0.0, %v1158
    %vm1191 = vcmp.ne.f32.partialorder %v1175, %v1175
    %vm1192 = vcmp.ne.f32.partialorder %v1176, %v1176
    %vm1193 = vcmp.ne.f32.partialorder %v1177, %v1177
    %vm1194 = vcmp.ne.f32.partialorder %v1178, %v1178
    %vm1195 = vcmp.ne.f32.partialorder %v1179, %v1179
    %vm1196 = vcmp.ne.f32.partialorder %v1180, %v1180
    %vm1197 = vcmp.ne.f32.partialorder %v1181, %v1181
    %vm1198 = vcmp.ne.f32.partialorder %v1182, %v1182
    %vm1199 = vcmp.ne.f32.partialorder %v1183, %v1183
    %vm1200 = vcmp.ne.f32.partialorder %v1184, %v1184
    %vm1201 = vcmp.ne.f32.partialorder %v1185, %v1185
    %vm1202 = vcmp.ne.f32.partialorder %v1186, %v1186
    %vm1203 = vcmp.ne.f32.partialorder %v1187, %v1187
    %vm1204 = vcmp.ne.f32.partialorder %v1188, %v1188
    %vm1205 = vcmp.ne.f32.partialorder %v1189, %v1189
    %vm1206 = vcmp.ne.f32.partialorder %v1190, %v1190
    %v1207 = vadd.f32 %v1143, 0.0
    %v1208 = vadd.f32 %v1144, 0.0
    %v1209 = vadd.f32 %v1145, 0.0
    %v1210 = vadd.f32 %v1146, 0.0
    %v1211 = vadd.f32 %v1147, 0.0
    %v1212 = vadd.f32 %v1148, 0.0
    %v1213 = vadd.f32 %v1149, 0.0
    %v1214 = vadd.f32 %v1150, 0.0
    %v1215 = vadd.f32 %v1151, 0.0
    %v1216 = vadd.f32 %v1152, 0.0
    %v1217 = vadd.f32 %v1153, 0.0
    %v1218 = vadd.f32 %v1154, 0.0
    %v1219 = vadd.f32 %v1155, 0.0
    %v1220 = vadd.f32 %v1156, 0.0
    %v1221 = vadd.f32 %v1157, 0.0
    %v1222 = vadd.f32 %v1158, 0.0
    %v1223 = vand.u32 2147483647, %v1175
    %v1224 = vand.u32 2147483647, %v1176
    %v1225 = vand.u32 2147483647, %v1177
    %v1226 = vand.u32 2147483647, %v1178
    %v1227 = vand.u32 2147483647, %v1179
    %v1228 = vand.u32 2147483647, %v1180
    %v1229 = vand.u32 2147483647, %v1181
    %v1230 = vand.u32 2147483647, %v1182
    %v1231 = vand.u32 2147483647, %v1183
    %v1232 = vand.u32 2147483647, %v1184
    %v1233 = vand.u32 2147483647, %v1185
    %v1234 = vand.u32 2147483647, %v1186
    %v1235 = vand.u32 2147483647, %v1187
    %v1236 = vand.u32 2147483647, %v1188
    %v1237 = vand.u32 2147483647, %v1189
    %v1238 = vand.u32 2147483647, %v1190
    %v1239 = vsub.f32 0.0, %v1223
    %v1240 = vsub.f32 0.0, %v1224
    %v1241 = vsub.f32 0.0, %v1225
    %v1242 = vsub.f32 0.0, %v1226
    %v1243 = vsub.f32 0.0, %v1227
    %v1244 = vsub.f32 0.0, %v1228
    %v1245 = vsub.f32 0.0, %v1229
    %v1246 = vsub.f32 0.0, %v1230
    %v1247 = vsub.f32 0.0, %v1231
    %v1248 = vsub.f32 0.0, %v1232
    %v1249 = vsub.f32 0.0, %v1233
    %v1250 = vsub.f32 0.0, %v1234
    %v1251 = vsub.f32 0.0, %v1235
    %v1252 = vsub.f32 0.0, %v1236
    %v1253 = vsub.f32 0.0, %v1237
    %v1254 = vsub.f32 0.0, %v1238
    %v1255 = vmul.f32 %v1239, 1.442695
    %v1256 = vpow.pop %v1255
    %v1257 = vmul.f32 %v1240, 1.442695
    %v1258 = vpow.pop %v1257
    %v1259 = vmul.f32 %v1241, 1.442695
    %v1260 = vpow.pop %v1259
    %v1261 = vmul.f32 %v1242, 1.442695
    %v1262 = vpow.pop %v1261
    %v1263 = vmul.f32 %v1243, 1.442695
    %v1264 = vpow.pop %v1263
    %v1265 = vmul.f32 %v1244, 1.442695
    %v1266 = vpow.pop %v1265
    %v1267 = vmul.f32 %v1245, 1.442695
    %v1268 = vpow.pop %v1267
    %v1269 = vmul.f32 %v1246, 1.442695
    %v1270 = vpow.pop %v1269
    %v1271 = vmul.f32 %v1247, 1.442695
    %v1272 = vpow.pop %v1271
    %v1273 = vmul.f32 %v1248, 1.442695
    %v1274 = vpow.pop %v1273
    %v1275 = vmul.f32 %v1249, 1.442695
    %v1276 = vpow.pop %v1275
    %v1277 = vmul.f32 %v1250, 1.442695
    %v1278 = vpow.pop %v1277
    %v1279 = vmul.f32 %v1251, 1.442695
    %v1280 = vpow.pop %v1279
    %v1281 = vmul.f32 %v1252, 1.442695
    %v1282 = vpow.pop %v1281
    %v1283 = vmul.f32 %v1253, 1.442695
    %v1284 = vpow.pop %v1283
    %v1285 = vmul.f32 %v1254, 1.442695
    %v1286 = vpow.pop %v1285
    %v1287 = vadd.f32 %v1256, 1.0
    %v1288 = vlog2.pop %v1287
    %v1289 = vmul.f32 %v1288, 0.6931472
    %v1290 = vmul.f32 -0.5, %v1256
    %v1291 = vadd.f32 %v1290, 1.0
    %v1292 = vmul.f32 %v1291, %v1256
    %v1293 = vand.u32 2147483647, %v1256
    %vm1294 = vcmp.lt.f32.partialorder %v1293, 0.0004427343
    %v1295 = vsel %vm1294, %v1292, %v1289
    %v1296 = vadd.f32 %v1258, 1.0
    %v1297 = vlog2.pop %v1296
    %v1298 = vmul.f32 %v1297, 0.6931472
    %v1299 = vmul.f32 -0.5, %v1258
    %v1300 = vadd.f32 %v1299, 1.0
    %v1301 = vmul.f32 %v1300, %v1258
    %v1302 = vand.u32 2147483647, %v1258
    %vm1303 = vcmp.lt.f32.partialorder %v1302, 0.0004427343
    %v1304 = vsel %vm1303, %v1301, %v1298
    %v1305 = vadd.f32 %v1260, 1.0
    %v1306 = vlog2.pop %v1305
    %v1307 = vmul.f32 %v1306, 0.6931472
    %v1308 = vmul.f32 -0.5, %v1260
    %v1309 = vadd.f32 %v1308, 1.0
    %v1310 = vmul.f32 %v1309, %v1260
    %v1311 = vand.u32 2147483647, %v1260
    %vm1312 = vcmp.lt.f32.partialorder %v1311, 0.0004427343
    %v1313 = vsel %vm1312, %v1310, %v1307
    %v1314 = vadd.f32 %v1262, 1.0
    %v1315 = vlog2.pop %v1314
    %v1316 = vmul.f32 %v1315, 0.6931472
    %v1317 = vmul.f32 -0.5, %v1262
    %v1318 = vadd.f32 %v1317, 1.0
    %v1319 = vmul.f32 %v1318, %v1262
    %v1320 = vand.u32 2147483647, %v1262
    %vm1321 = vcmp.lt.f32.partialorder %v1320, 0.0004427343
    %v1322 = vsel %vm1321, %v1319, %v1316
    %v1323 = vadd.f32 %v1264, 1.0
    %v1324 = vlog2.pop %v1323
    %v1325 = vmul.f32 %v1324, 0.6931472
    %v1326 = vmul.f32 -0.5, %v1264
    %v1327 = vadd.f32 %v1326, 1.0
    %v1328 = vmul.f32 %v1327, %v1264
    %v1329 = vand.u32 2147483647, %v1264
    %vm1330 = vcmp.lt.f32.partialorder %v1329, 0.0004427343
    %v1331 = vsel %vm1330, %v1328, %v1325
    %v1332 = vadd.f32 %v1266, 1.0
    %v1333 = vlog2.pop %v1332
    %v1334 = vmul.f32 %v1333, 0.6931472
    %v1335 = vmul.f32 -0.5, %v1266
    %v1336 = vadd.f32 %v1335, 1.0
    %v1337 = vmul.f32 %v1336, %v1266
    %v1338 = vand.u32 2147483647, %v1266
    %vm1339 = vcmp.lt.f32.partialorder %v1338, 0.0004427343
    %v1340 = vsel %vm1339, %v1337, %v1334
    %v1341 = vadd.f32 %v1268, 1.0
    %v1342 = vlog2.pop %v1341
    %v1343 = vmul.f32 %v1342, 0.6931472
    %v1344 = vmul.f32 -0.5, %v1268
    %v1345 = vadd.f32 %v1344, 1.0
    %v1346 = vmul.f32 %v1345, %v1268
    %v1347 = vand.u32 2147483647, %v1268
    %vm1348 = vcmp.lt.f32.partialorder %v1347, 0.0004427343
    %v1349 = vsel %vm1348, %v1346, %v1343
    %v1350 = vadd.f32 %v1270, 1.0
    %v1351 = vlog2.pop %v1350
    %v1352 = vmul.f32 %v1351, 0.6931472
    %v1353 = vmul.f32 -0.5, %v1270
    %v1354 = vadd.f32 %v1353, 1.0
    %v1355 = vmul.f32 %v1354, %v1270
    %v1356 = vand.u32 2147483647, %v1270
    %vm1357 = vcmp.lt.f32.partialorder %v1356, 0.0004427343
    %v1358 = vsel %vm1357, %v1355, %v1352
    %v1359 = vadd.f32 %v1272, 1.0
    %v1360 = vlog2.pop %v1359
    %v1361 = vmul.f32 %v1360, 0.6931472
    %v1362 = vmul.f32 -0.5, %v1272
    %v1363 = vadd.f32 %v1362, 1.0
    %v1364 = vmul.f32 %v1363, %v1272
    %v1365 = vand.u32 2147483647, %v1272
    %vm1366 = vcmp.lt.f32.partialorder %v1365, 0.0004427343
    %v1367 = vsel %vm1366, %v1364, %v1361
    %v1368 = vadd.f32 %v1274, 1.0
    %v1369 = vlog2.pop %v1368
    %v1370 = vmul.f32 %v1369, 0.6931472
    %v1371 = vmul.f32 -0.5, %v1274
    %v1372 = vadd.f32 %v1371, 1.0
    %v1373 = vmul.f32 %v1372, %v1274
    %v1374 = vand.u32 2147483647, %v1274
    %vm1375 = vcmp.lt.f32.partialorder %v1374, 0.0004427343
    %v1376 = vsel %vm1375, %v1373, %v1370
    %v1377 = vadd.f32 %v1276, 1.0
    %v1378 = vlog2.pop %v1377
    %v1379 = vmul.f32 %v1378, 0.6931472
    %v1380 = vmul.f32 -0.5, %v1276
    %v1381 = vadd.f32 %v1380, 1.0
    %v1382 = vmul.f32 %v1381, %v1276
    %v1383 = vand.u32 2147483647, %v1276
    %vm1384 = vcmp.lt.f32.partialorder %v1383, 0.0004427343
    %v1385 = vsel %vm1384, %v1382, %v1379
    %v1386 = vadd.f32 %v1278, 1.0
    %v1387 = vlog2.pop %v1386
    %v1388 = vmul.f32 %v1387, 0.6931472
    %v1389 = vmul.f32 -0.5, %v1278
    %v1390 = vadd.f32 %v1389, 1.0
    %v1391 = vmul.f32 %v1390, %v1278
    %v1392 = vand.u32 2147483647, %v1278
    %vm1393 = vcmp.lt.f32.partialorder %v1392, 0.0004427343
    %v1394 = vsel %vm1393, %v1391, %v1388
    %v1395 = vadd.f32 %v1280, 1.0
    %v1396 = vlog2.pop %v1395
    %v1397 = vmul.f32 %v1396, 0.6931472
    %v1398 = vmul.f32 -0.5, %v1280
    %v1399 = vadd.f32 %v1398, 1.0
    %v1400 = vmul.f32 %v1399, %v1280
    %v1401 = vand.u32 2147483647, %v1280
    %vm1402 = vcmp.lt.f32.partialorder %v1401, 0.0004427343
    %v1403 = vsel %vm1402, %v1400, %v1397
    %v1404 = vadd.f32 %v1282, 1.0
    %v1405 = vlog2.pop %v1404
    %v1406 = vmul.f32 %v1405, 0.6931472
    %v1407 = vmul.f32 -0.5, %v1282
    %v1408 = vadd.f32 %v1407, 1.0
    %v1409 = vmul.f32 %v1408, %v1282
    %v1410 = vand.u32 2147483647, %v1282
    %vm1411 = vcmp.lt.f32.partialorder %v1410, 0.0004427343
    %v1412 = vsel %vm1411, %v1409, %v1406
    %v1413 = vadd.f32 %v1284, 1.0
    %v1414 = vlog2.pop %v1413
    %v1415 = vmul.f32 %v1414, 0.6931472
    %v1416 = vmul.f32 -0.5, %v1284
    %v1417 = vadd.f32 %v1416, 1.0
    %v1418 = vmul.f32 %v1417, %v1284
    %v1419 = vand.u32 2147483647, %v1284
    %vm1420 = vcmp.lt.f32.partialorder %v1419, 0.0004427343
    %v1421 = vsel %vm1420, %v1418, %v1415
    %v1422 = vadd.f32 %v1286, 1.0
    %v1423 = vlog2.pop %v1422
    %v1424 = vmul.f32 %v1423, 0.6931472
    %v1425 = vmul.f32 -0.5, %v1286
    %v1426 = vadd.f32 %v1425, 1.0
    %v1427 = vmul.f32 %v1426, %v1286
    %v1428 = vand.u32 2147483647, %v1286
    %vm1429 = vcmp.lt.f32.partialorder %v1428, 0.0004427343
    %v1430 = vsel %vm1429, %v1427, %v1424
    %v1431 = vadd.f32 %v1159, %v1295
    %v1432 = vadd.f32 %v1160, %v1304
    %v1433 = vadd.f32 %v1161, %v1313
    %v1434 = vadd.f32 %v1162, %v1322
    %v1435 = vadd.f32 %v1163, %v1331
    %v1436 = vadd.f32 %v1164, %v1340
    %v1437 = vadd.f32 %v1165, %v1349
    %v1438 = vadd.f32 %v1166, %v1358
    %v1439 = vadd.f32 %v1167, %v1367
    %v1440 = vadd.f32 %v1168, %v1376
    %v1441 = vadd.f32 %v1169, %v1385
    %v1442 = vadd.f32 %v1170, %v1394
    %v1443 = vadd.f32 %v1171, %v1403
    %v1444 = vadd.f32 %v1172, %v1412
    %v1445 = vadd.f32 %v1173, %v1421
    %v1446 = vadd.f32 %v1174, %v1430
    %v1447 = vsel %vm1191, %v1207, %v1431
    %v1448 = vsel %vm1192, %v1208, %v1432
    %v1449 = vsel %vm1193, %v1209, %v1433
    %v1450 = vsel %vm1194, %v1210, %v1434
    %v1451 = vsel %vm1195, %v1211, %v1435
    %v1452 = vsel %vm1196, %v1212, %v1436
    %v1453 = vsel %vm1197, %v1213, %v1437
    %v1454 = vsel %vm1198, %v1214, %v1438
    %v1455 = vsel %vm1199, %v1215, %v1439
    %v1456 = vsel %vm1200, %v1216, %v1440
    %v1457 = vsel %vm1201, %v1217, %v1441
    %v1458 = vsel %vm1202, %v1218, %v1442
    %v1459 = vsel %vm1203, %v1219, %v1443
    %v1460 = vsel %vm1204, %v1220, %v1444
    %v1461 = vsel %vm1205, %v1221, %v1445
    %v1462 = vsel %vm1206, %v1222, %v1446
    %v1463 = vld [vmem:[#allocation17] sm:$0xff]
    %v1464 = vld [vmem:[#allocation17 + $0x8] sm:$0xff]
    %v1465 = vld [vmem:[#allocation17 + $0x10] sm:$0xff]
    %v1466 = vld [vmem:[#allocation17 + $0x18] sm:$0xff]
    %v1467 = vld [vmem:[#allocation17 + $0x20] sm:$0xff]
    %v1468 = vld [vmem:[#allocation17 + $0x28] sm:$0xff]
    %v1469 = vld [vmem:[#allocation17 + $0x30] sm:$0xff]
    %v1470 = vld [vmem:[#allocation17 + $0x38] sm:$0xff]
    %v1471 = vld [vmem:[#allocation17 + $0x40] sm:$0xff]
    %v1472 = vld [vmem:[#allocation17 + $0x48] sm:$0xff]
    %v1473 = vld [vmem:[#allocation17 + $0x50] sm:$0xff]
    %v1474 = vld [vmem:[#allocation17 + $0x58] sm:$0xff]
    %v1475 = vld [vmem:[#allocation17 + $0x60] sm:$0xff]
    %v1476 = vld [vmem:[#allocation17 + $0x68] sm:$0xff]
    %v1477 = vld [vmem:[#allocation17 + $0x70] sm:$0xff]
    %v1478 = vld [vmem:[#allocation17 + $0x78] sm:$0xff]
    %v1479 = vmul.f32 %v1447, %v1463
    %v1480 = vmul.f32 %v1448, %v1464
    %v1481 = vmul.f32 %v1449, %v1465
    %v1482 = vmul.f32 %v1450, %v1466
    %v1483 = vmul.f32 %v1451, %v1467
    %v1484 = vmul.f32 %v1452, %v1468
    %v1485 = vmul.f32 %v1453, %v1469
    %v1486 = vmul.f32 %v1454, %v1470
    %v1487 = vmul.f32 %v1455, %v1471
    %v1488 = vmul.f32 %v1456, %v1472
    %v1489 = vmul.f32 %v1457, %v1473
    %v1490 = vmul.f32 %v1458, %v1474
    %v1491 = vmul.f32 %v1459, %v1475
    %v1492 = vmul.f32 %v1460, %v1476
    %v1493 = vmul.f32 %v1461, %v1477
    %v1494 = vmul.f32 %v1462, %v1478
    %v1495 = vadd.f32 %v1127, %v1479
    %v1496 = vadd.f32 %v1128, %v1480
    %v1497 = vadd.f32 %v1129, %v1481
    %v1498 = vadd.f32 %v1130, %v1482
    %v1499 = vadd.f32 %v1131, %v1483
    %v1500 = vadd.f32 %v1132, %v1484
    %v1501 = vadd.f32 %v1133, %v1485
    %v1502 = vadd.f32 %v1134, %v1486
    %v1503 = vadd.f32 %v1135, %v1487
    %v1504 = vadd.f32 %v1136, %v1488
    %v1505 = vadd.f32 %v1137, %v1489
    %v1506 = vadd.f32 %v1138, %v1490
    %v1507 = vadd.f32 %v1139, %v1491
    %v1508 = vadd.f32 %v1140, %v1492
    %v1509 = vadd.f32 %v1141, %v1493
    %v1510 = vadd.f32 %v1142, %v1494
    %v1511 = vld [vmem:[%s16] sm:$0x1]
    %v1512 = vld [vmem:[%s17] sm:$0x1]
    %v1513 = vmax.f32 %v1512, 0.0
    %v1514 = vsub.f32 0.0, %v1512
    %vm1515 = vcmp.ne.f32.partialorder %v1514, %v1514
    %v1516 = vadd.f32 %v1512, 0.0
    %v1517 = vand.u32 2147483647, %v1514
    %v1518 = vsub.f32 0.0, %v1517
    %v1519 = vmul.f32 %v1518, 1.442695
    %v1520 = vpow.pop %v1519
    %v1521 = vadd.f32 %v1520, 1.0
    %v1522 = vlog2.pop %v1521
    %v1523 = vmul.f32 %v1522, 0.6931472
    %v1524 = vmul.f32 -0.5, %v1520
    %v1525 = vadd.f32 %v1524, 1.0
    %v1526 = vmul.f32 %v1525, %v1520
    %v1527 = vand.u32 2147483647, %v1520
    %vm1528 = vcmp.lt.f32.partialorder %v1527, 0.0004427343
    %v1529 = vsel %vm1528, %v1526, %v1523
    %v1530 = vadd.f32 %v1513, %v1529
    %v1531 = vsel %vm1515, %v1516, %v1530
    %v1532 = vld [vmem:[%s18] sm:$0x1]
    %v1533 = vmul.f32 %v1531, %v1532
    %v1534 = vadd.f32 %v1511, %v1533
    %v1535 = vpack.c.bf16 %v1126, %v1126
    %v1536 = vpack.c.bf16 %v1496, %v1495
    %v1537 = vpack.c.bf16 %v1498, %v1497
    %v1538 = vpack.c.bf16 %v1500, %v1499
    %v1539 = vpack.c.bf16 %v1502, %v1501
    %v1540 = vpack.c.bf16 %v1504, %v1503
    %v1541 = vpack.c.bf16 %v1506, %v1505
    %v1542 = vpack.c.bf16 %v1508, %v1507
    %v1543 = vpack.c.bf16 %v1510, %v1509
    %v1545 = vlaneseq
    %v1546 = vshrl.u32 %v1545, 7
    %v1547 = vsub.s32 0, %v1546
    %v1548 = vrot.slane %v1534, %v1547
    %1550 = vmatprep.subr.bf16.mxu0 0
    %1551 = vmatpush1.bf16.msra.mxu0 %v1536
    %1552 = vmatprep.subr.bf16.mxu0 0
    %1553 = vmatpush1.bf16.msra.mxu0 %v1537
    %1554 = vmatprep.subr.bf16.mxu0 0
    %1555 = vmatpush1.bf16.msra.mxu0 %v1538
    %1556 = vmatprep.subr.bf16.mxu0 0
    %1557 = vmatpush1.bf16.msra.mxu0 %v1539
    %1558 = vmatprep.subr.bf16.mxu0 0
    %1559 = vmatpush1.bf16.msra.mxu0 %v1540
    %1560 = vmatprep.subr.bf16.mxu0 0
    %1561 = vmatpush1.bf16.msra.mxu0 %v1541
    %1562 = vmatprep.subr.bf16.mxu0 0
    %1563 = vmatpush1.bf16.msra.mxu0 %v1542
    %1564 = vmatprep.subr.bf16.mxu0 0
    %1565 = vmatpush1.bf16.msra.mxu0 %v1543
    %1566 = vmatprep.subr.bf16.mxu0 0
    %1567 = vmatpush1.bf16.msra.mxu0 0
    %1568 = vmatprep.subr.bf16.mxu0 0
    %1569 = vmatpush1.bf16.msra.mxu0 0
    %1570 = vmatprep.subr.bf16.mxu0 0
    %1571 = vmatpush1.bf16.msra.mxu0 0
    %1572 = vmatprep.subr.bf16.mxu0 0
    %1573 = vmatpush1.bf16.msra.mxu0 0
    %1574 = vmatprep.subr.bf16.mxu0 0
    %1575 = vmatpush1.bf16.msra.mxu0 0
    %1576 = vmatprep.subr.bf16.mxu0 0
    %1577 = vmatpush1.bf16.msra.mxu0 0
    %1578 = vmatprep.subr.bf16.mxu0 0
    %1579 = vmatpush1.bf16.msra.mxu0 0
    %1580 = vmatprep.subr.bf16.mxu0 0
    %1581 = vmatpush1.bf16.msra.mxu0 0
    %1582 = vmatprep.mubr.bf16.mxu0 0
    %1583 = vmatmul.mubr.bf16.gmra.mrb[0].mxu0 %v1535
    %v1584 = vpop.f32.mrb[0].mxu0
    %v1585 = vadd.f32 %v1548, %v1584
    %v1586 = vpop.f32.mrb[0].mxu0
    %v1587 = vpop.f32.mrb[0].mxu0
    %v1588 = vpop.f32.mrb[0].mxu0
    %1589 = vdwg.mxu0
    %1590 = vst [vmem:[#allocation19] sm:$0xff] %v1585
    // Predicated region
    $region118: #{tpu_custom_call.1} parent=1 // pred_check
      _
    $region119: #{tpu_custom_call.1} parent=1 // pred_check_branch
      %1592 = sbr.rel (0) target = $region121
    $region120: #{tpu_custom_call.1} parent=1 // pred_region
      %s1594 = ssub.s32 128, 128
      %1595 = vsyncadd [#allocation4], %s1594
      %s1597 = sshll.u32 [#allocation19], 4
      %s1598 = int_to_ptr.vmem [resolvable:$true] %s1597
      %1600 = dma.vmem_to_hbm [thread:$0]  %s1598, 128, %s19, [#allocation4]
    $region121: #{tpu_custom_call.1} parent=1 // pred_fallthru
      _
    // Predicated region
    $region122: #{tpu_custom_call.1} parent=1 // pred_check
      _
    $region123: #{tpu_custom_call.1} parent=1 // pred_check_branch
      %1602 = sbr.rel (0) target = $region125
    $region124: #{tpu_custom_call.1} parent=1 // pred_region
      %1603 = dma.done [#allocation4], 128
    $region125: #{tpu_custom_call.1} parent=1 // pred_fallthru
      _
    %1604 = vsyncpa [#allocation3], 1
    %1605 = vsyncpa [#allocation6], 1
    %1606 = vsyncpa [#allocation9], 1
    %1607 = vsyncpa [#allocation12], 1
    %1608 = vsyncpa [#allocation15], 1
    %1609 = vsyncpa [#allocation18], 1
    %1610 = vsyncpa [#allocation4], 1

</llo_original>
